<compile_context>
chip_gen: v6e
topology: v6e:2x2x1
jax: 0.10.0
libtpu: 0.0.40
codegen_flags: <defaults>
</compile_context>

<pallas_src>
import functools

import jax
import jax.numpy as jnp
from jax.experimental import pallas as pl
from jax.experimental.pallas import tpu as pltpu

# Sentinels produced by GlobalPointer masking: -1e12/sqrt(64) and -2e12/sqrt(64).
# Python floats so kernels never capture traced arrays.
MASK1 = -125000000000.0
MASK2 = -250000000000.0
BIG = 1.0e12


def _vmem_capacity_bytes():
    try:
        return int(pltpu.get_tpu_info().vmem_capacity_bytes)
    except Exception:
        return 128 * 1024 * 1024


_VMEM_CAP = _vmem_capacity_bytes()
# generation-aware scoped-VMEM budget: ~102 MiB on v5e/v6e (128 MiB physical),
# ~44 MiB on v7x (64 MiB physical), with headroom for compiler scratch.
VMEM_LIMIT = max(32 * 1024 * 1024,
                 min(int(_VMEM_CAP * 0.8), _VMEM_CAP - 20 * 1024 * 1024))


def _pick_head_tile(heads, seq, d, inner):
    """Largest head tile whose double-buffered [ht,S,S] f32 output block fits the
    generation-aware VMEM budget next to the resident (double-buffered) bf16
    weight, the bf16 x block and in-kernel temporaries."""
    nw = heads * 2 * inner
    resident = 2 * (nw * d * 2)            # double-buffered resident bf16 weight
    resident += 2 * (seq * d * 2)          # double-buffered bf16 x block
    resident += 6 * 1024 * 1024            # proj temp / mask / bias / scratch headroom
    per_head = 2 * seq * seq * 4 + seq * 2 * inner * 4
    avail = VMEM_LIMIT - resident
    cap = max(1, avail // per_head) if avail > 0 else 1
    ht = int(max(1, min(heads, cap)))
    while heads % ht:
        ht -= 1
    return ht


# --------------------------------------------------------------------------
# Fused entity stage, one grid step per batch element:
#   ent_state = rel_pred + hidden_state
#   -> GlobalPointer(heads=2, RoPE=True, tril_mask=True)     -> entity_logits
#   -> sentinel clean, row/col sums, sigmoid gates, shared linear,
#      residual, LayerNorm                                    -> h_state, t_state (bf16)
# --------------------------------------------------------------------------
def _entity_fused_kernel(mask_ref, hid_ref, relp_ref, tril_ref,
                         wq_ref, bq_ref, wr_ref, br_ref, cos_ref, sin_ref,
                         lin_w_ref, lin_b_ref, ln_g_ref, ln_b_ref,
                         ent_out_ref, h_out_ref, t_out_ref, *, inner):
    pad = mask_ref[...]                                     # [1, S] f32
    hid = hid_ref[...]                                      # [S, D] f32
    S = hid.shape[0]

    # ent_state = rel_pred + hidden_state (rel_pred precomputed batched in XLA)
    x = hid + relp_ref[...]
    xb = x.astype(jnp.bfloat16)

    # GlobalPointer projection; RoPE "rotate half" folded into wr/br on host.
    proj = jnp.dot(xb, wq_ref[...], preferred_element_type=jnp.float32) + bq_ref[...]
    proj_rot = jnp.dot(xb, wr_ref[...], preferred_element_type=jnp.float32) + br_ref[...]
    cos = cos_ref[...]                                      # [S, inner]
    sin = sin_ref[...]

    inv = 1.0 / (float(inner) ** 0.5)
    # additive mask: key-side padding + strict lower-triangle (constant, resident)
    addm = (pad - 1.0) * (BIG * inv) - tril_ref[...]        # [S, S]
    pad_s = pad * inv                                       # [1, S]

    ent_clean = None
    for h in range(2):                                      # entity model: 2 heads
        qo = 2 * inner * h
        ko = qo + inner
        q = proj[:, qo:qo + inner] * cos + proj_rot[:, qo:qo + inner] * sin
        k = proj[:, ko:ko + inner] * cos + proj_rot[:, ko:ko + inner] * sin
        lg = jax.lax.dot_general(q.astype(jnp.bfloat16), k.astype(jnp.bfloat16),
                                 (((1,), (1,)), ((), ())),
                                 preferred_element_type=jnp.float32)         # [S, S]
        logits = lg * pad_s + addm
        ent_out_ref[h] = logits
        c = jnp.where(logits == MASK1, 0.0, logits)
        c = jnp.where(c == MASK2, 0.0, c)
        ent_clean = c if ent_clean is None else ent_clean + c

    # h-gate: column sums (via lhs-transposed dot -> [S,1] sublane layout directly),
    # t-gate: row sums (lane reduction, off the MXU).
    ones_col = jnp.ones((S, 1), jnp.float32)
    hsum = jax.lax.dot_general(ent_clean, ones_col, (((0,), (0,)), ((), ())),
                               preferred_element_type=jnp.float32)            # [S, 1]
    tsum = jnp.sum(ent_clean, axis=-1, keepdims=True)                          # [S, 1]

    def gate(s):
        g = jax.nn.sigmoid(s)
        return jnp.where(g == 0.5, 0.0, g)

    lin_w = lin_w_ref[...]                                  # [D, D] bf16
    lin_b = lin_b_ref[...]
    gamma = ln_g_ref[...]
    beta = ln_b_ref[...]

    def branch(g):
        # gated linear (dropout = identity), residual, LayerNorm (eps=1e-5)
        v = jnp.dot((g * hid).astype(jnp.bfloat16), lin_w,
                    preferred_element_type=jnp.float32) + lin_b
        v = v + hid
        mu = jnp.mean(v, axis=-1, keepdims=True)
        var = jnp.mean(jnp.square(v - mu), axis=-1, keepdims=True)
        return (v - mu) * jax.lax.rsqrt(var + 1e-5) * gamma + beta

    h_out_ref[...] = branch(gate(hsum)).astype(jnp.bfloat16)
    t_out_ref[...] = branch(gate(tsum)).astype(jnp.bfloat16)


def entity_fused(hidden, mask3, rel_pred, tril_neg,
                 gp_w, gp_b, gp_wr, gp_br, cos, sin,
                 lin_w, lin_b, ln_g, ln_b, *, inner):
    B, S, D = hidden.shape
    N = gp_w.shape[1]
    kernel = functools.partial(_entity_fused_kernel, inner=inner)
    return pl.pallas_call(
        kernel,
        out_shape=(jax.ShapeDtypeStruct((B, 2, S, S), jnp.float32),
                   jax.ShapeDtypeStruct((B, S, D), jnp.bfloat16),
                   jax.ShapeDtypeStruct((B, S, D), jnp.bfloat16)),
        grid=(B,),
        in_specs=[pl.BlockSpec((None, 1, S), lambda b: (b, 0, 0)),
                  pl.BlockSpec((None, S, D), lambda b: (b, 0, 0)),
                  pl.BlockSpec((None, 1, D), lambda b: (b, 0, 0)),
                  pl.BlockSpec((S, S), lambda b: (0, 0)),
                  pl.BlockSpec((D, N), lambda b: (0, 0)),
                  pl.BlockSpec((1, N), lambda b: (0, 0)),
                  pl.BlockSpec((D, N), lambda b: (0, 0)),
                  pl.BlockSpec((1, N), lambda b: (0, 0)),
                  pl.BlockSpec((S, inner), lambda b: (0, 0)),
                  pl.BlockSpec((S, inner), lambda b: (0, 0)),
                  pl.BlockSpec((D, D), lambda b: (0, 0)),
                  pl.BlockSpec((1, D), lambda b: (0, 0)),
                  pl.BlockSpec((1, D), lambda b: (0, 0)),
                  pl.BlockSpec((1, D), lambda b: (0, 0))],
        out_specs=(pl.BlockSpec((None, 2, S, S), lambda b: (b, 0, 0, 0)),
                   pl.BlockSpec((None, S, D), lambda b: (b, 0, 0)),
                   pl.BlockSpec((None, S, D), lambda b: (b, 0, 0))),
        compiler_params=pltpu.CompilerParams(
            dimension_semantics=("parallel",), vmem_limit_bytes=VMEM_LIMIT),
        # TODO(synk): on v7x (2 TCs) a second parallel axis would help for tiny B;
        # skipped because the gate-LN fusion needs both heads in one step.
    )(mask3, hidden, rel_pred, tril_neg, gp_w, gp_b, gp_wr, gp_br,
      cos, sin, lin_w, lin_b, ln_g, ln_b)


# --------------------------------------------------------------------------
# Plain GlobalPointer (RoPE=False, tril_mask=False) for the head/tail models.
# grid = (B, n_head_tiles): head-tile axis innermost so x stays resident across
# it; the FULL transposed weight [NW, D] has a constant index_map (fetched once)
# and is sliced per tile inside the kernel on the sublane axis.
# --------------------------------------------------------------------------
def _gp_plain_kernel(mask_ref, x_ref, w_ref, b_ref, out_ref, *, ht, inner):
    pad = mask_ref[...]                                     # [1, S] f32
    xb = x_ref[...]                                         # [S, D] bf16
    tw = ht * 2 * inner                                     # multiple of 128 (inner=64)
    start = pl.multiple_of(pl.program_id(1) * tw, tw)
    w = w_ref[pl.ds(start, tw), :]                          # [tw, D] bf16 slice of resident weight
    proj = jax.lax.dot_general(xb, w, (((1,), (1,)), ((), ())),
                               preferred_element_type=jnp.float32) + b_ref[...]   # [S, tw]

    inv = 1.0 / (float(inner) ** 0.5)
    addm = (pad - 1.0) * (BIG * inv)                        # [1, S]
    pad_s = pad * inv

    # TODO(synk): 64-lane-offset q/k slices may relayout; if the Mosaic dump shows
    # copies, pad each q/k half to 128 lanes on the host.
    for h in range(ht):
        qo = 2 * inner * h
        ko = qo + inner
        lg = jax.lax.dot_general(proj[:, qo:qo + inner].astype(jnp.bfloat16),
                                 proj[:, ko:ko + inner].astype(jnp.bfloat16),
                                 (((1,), (1,)), ((), ())),
                                 preferred_element_type=jnp.float32)          # [S, S]
        out_ref[h] = lg * pad_s + addm


def global_pointer_plain(x, mask3, w_t, b, *, heads, inner):
    """x: [B,S,D] bf16; w_t: transposed weight [heads*2*inner, D] bf16; b: [1, heads*2*inner]."""
    B, S, D = x.shape
    NW = w_t.shape[0]
    ht = _pick_head_tile(heads, S, D, inner)
    n_ht = heads // ht
    tw = ht * 2 * inner
    kernel = functools.partial(_gp_plain_kernel, ht=ht, inner=inner)
    return pl.pallas_call(
        kernel,
        out_shape=jax.ShapeDtypeStruct((B, heads, S, S), jnp.float32),
        grid=(B, n_ht),
        in_specs=[pl.BlockSpec((None, 1, S), lambda bb, h: (bb, 0, 0)),
                  pl.BlockSpec((None, S, D), lambda bb, h: (bb, 0, 0)),
                  pl.BlockSpec((NW, D), lambda bb, h: (0, 0)),       # resident full weight
                  pl.BlockSpec((1, tw), lambda bb, h: (0, h))],      # per-tile bias (tiny)
        out_specs=pl.BlockSpec((None, ht, S, S), lambda bb, h: (bb, h, 0, 0)),
        compiler_params=pltpu.CompilerParams(
            dimension_semantics=("parallel", "parallel"),
            vmem_limit_bytes=VMEM_LIMIT),
    )(mask3, x, w_t, b)


# --------------------------------------------------------------------------
# glue: RoPE tables, RoPE weight folding, batched rel_pred, full forward
# --------------------------------------------------------------------------
def rope_tables(S, I):
    pos = jnp.arange(S, dtype=jnp.float32)[:, None]
    theta = jnp.power(10000.0, -2.0 * jnp.arange(I // 2, dtype=jnp.float32) / I)
    ang = pos * theta                                       # [S, I//2]
    cos = jnp.repeat(jnp.cos(ang), 2, axis=-1)              # [S, I]
    sin = jnp.repeat(jnp.sin(ang), 2, axis=-1)              # [S, I]
    return cos, sin


def fold_rope_rotation(w, b, inner):
    """Fold the interleaved 'rotate half' (x2[2i] = -x[2i+1], x2[2i+1] = x[2i])
    into the projection weights/bias: rotated_proj = x @ w_rot + b_rot."""
    D, N = w.shape
    wg = w.reshape(D, N // inner, inner // 2, 2)
    w_rot = jnp.stack([-wg[..., 1], wg[..., 0]], axis=-1).reshape(D, N)
    bg = b.reshape(1, N // inner, inner // 2, 2)
    b_rot = jnp.stack([-bg[..., 1], bg[..., 0]], axis=-1).reshape(1, N)
    return w_rot, b_rot


def remodel_forward(params, hidden_state, attention_mask, rel_list):
    B, S, D = hidden_state.shape
    R = rel_list.shape[1]
    I = params["gp_ent_w"].shape[1] // (2 * 2)              # GlobalPointer inner dim
    maskf = attention_mask.astype(jnp.float32)              # [B, S]
    mask3 = maskf[:, None, :]                               # [B, 1, S]

    # --- batched XLA glue (tiny): embedding gather, masked_avgpool,
    #     MultiNonLinearClassifier, rel_pred (M=B instead of per-step M=1 matmuls).
    #     AtrousMultiHeadedAttention treated as identity on rel embeddings.
    rel_emd = jnp.take(params["rel_emb"], rel_list, axis=0)              # [B, R, D]
    score = jax.nn.softmax(jnp.where(maskf == 0.0, -1.0e9, maskf), axis=-1)
    h_avg = jnp.einsum('bs,bsd->bd', score, hidden_state)                # [B, D]
    f = jnp.maximum(h_avg @ params["mnl_w1"] + params["mnl_b1"], 0.0)    # ReLU; dropout=id
    fo = f @ params["mnl_w2"] + params["mnl_b2"]                         # [B, R]
    rel_pred = jnp.einsum('br,brd->bd', fo, rel_emd)[:, None, :]         # [B, 1, D]

    cos, sin = rope_tables(S, I)
    wq_rot, bq_rot = fold_rope_rotation(params["gp_ent_w"], params["gp_ent_b"], I)
    inv = 1.0 / (float(I) ** 0.5)
    row = jnp.arange(S, dtype=jnp.int32)[:, None]
    col = jnp.arange(S, dtype=jnp.int32)[None, :]
    tril_neg = jnp.where(row > col, jnp.float32(BIG * inv), jnp.float32(0.0))   # [S, S]

    # fused: entity GlobalPointer (RoPE, tril) + sentinel clean + gates +
    #        shared linear + residual + LayerNorm  -> entity logits, h/t states (bf16)
    entity_logits, h_state, t_state = entity_fused(
        hidden_state, mask3, rel_pred, tril_neg,
        params["gp_ent_w"].astype(jnp.bfloat16), params["gp_ent_b"],
        wq_rot.astype(jnp.bfloat16), bq_rot, cos, sin,
        params["lin_wt"].astype(jnp.bfloat16), params["lin_b"],
        params["ln_g"], params["ln_b"], inner=I)

    # head/tail GlobalPointer: transposed bf16 weights for resident-weight slicing.
    w_head_t = params["gp_head_w"].T.astype(jnp.bfloat16)                # [R*2*I, D]
    w_tail_t = params["gp_tail_w"].T.astype(jnp.bfloat16)
    head_logits = global_pointer_plain(h_state, mask3, w_head_t,
                                       params["gp_head_b"], heads=R, inner=I)
    tail_logits = global_pointer_plain(t_state, mask3, w_tail_t,
                                       params["gp_tail_b"], heads=R, inner=I)
    return entity_logits, head_logits, tail_logits


if __name__ == "__main__":
    # small shapes: batch=2, seq=8, bert_dim=64, num_rel=4, GlobalPointer inner=64
    B, S, D, R, I = 2, 8, 64, 4, 64
    key = jax.random.PRNGKey(0)
    ks = jax.random.split(key, 14)

    def rnd(k, shape, s=0.05):
        return s * jax.random.normal(k, shape, dtype=jnp.float32)

    params = dict(
        rel_emb=rnd(ks[0], (R, D), 0.1),
        gp_ent_w=rnd(ks[1], (D, 2 * 2 * I)), gp_ent_b=rnd(ks[2], (1, 2 * 2 * I)),
        gp_head_w=rnd(ks[3], (D, R * 2 * I)), gp_head_b=rnd(ks[4], (1, R * 2 * I)),
        gp_tail_w=rnd(ks[5], (D, R * 2 * I)), gp_tail_b=rnd(ks[6], (1, R * 2 * I)),
        lin_wt=rnd(ks[7], (D, D)), lin_b=rnd(ks[8], (1, D)),
        ln_g=1.0 + rnd(ks[9], (1, D), 0.02), ln_b=rnd(ks[10], (1, D), 0.02),
        mnl_w1=rnd(ks[11], (D, D // 2)), mnl_b1=jnp.zeros((1, D // 2), jnp.float32),
        mnl_w2=rnd(ks[12], (D // 2, R)), mnl_b2=jnp.zeros((1, R), jnp.float32),
    )

    hidden_state = jax.random.normal(ks[13], (B, S, D), dtype=jnp.float32)
    attention_mask = jnp.array([[1] * S, [1] * 5 + [0] * (S - 5)], dtype=jnp.int32)
    rel_list = jnp.tile(jnp.arange(R, dtype=jnp.int32)[None, :], (B, 1))

    fwd = jax.jit(remodel_forward)
    entity_logits, head_logits, tail_logits = fwd(
        params, hidden_state, attention_mask, rel_list)
    jax.block_until_ready((entity_logits, head_logits, tail_logits))

    assert entity_logits.shape == (B, 2, S, S)
    assert head_logits.shape == (B, R, S, S)
    assert tail_logits.shape == (B, R, S, S)
    assert bool(jnp.all(jnp.isfinite(entity_logits)))
    print("KERNEL_OK")
</pallas_src>

<mosaic_0001>
module attributes {stable_mosaic.version = 11 : i64} {
  func.func @_entity_fused_kernel(%arg0: i32, %arg1: memref<1x1x8xf32, #tpu.memory_space<vmem>>, %arg2: memref<1x8x64xf32, #tpu.memory_space<vmem>>, %arg3: memref<1x1x64xf32, #tpu.memory_space<vmem>>, %arg4: memref<8x8xf32, #tpu.memory_space<vmem>>, %arg5: memref<64x256xbf16, #tpu.memory_space<vmem>>, %arg6: memref<1x256xf32, #tpu.memory_space<vmem>>, %arg7: memref<64x256xbf16, #tpu.memory_space<vmem>>, %arg8: memref<1x256xf32, #tpu.memory_space<vmem>>, %arg9: memref<8x64xf32, #tpu.memory_space<vmem>>, %arg10: memref<8x64xf32, #tpu.memory_space<vmem>>, %arg11: memref<64x64xbf16, #tpu.memory_space<vmem>>, %arg12: memref<1x64xf32, #tpu.memory_space<vmem>>, %arg13: memref<1x64xf32, #tpu.memory_space<vmem>>, %arg14: memref<1x64xf32, #tpu.memory_space<vmem>>, %arg15: memref<1x2x8x8xf32, #tpu.memory_space<vmem>>, %arg16: memref<1x8x64xbf16, #tpu.memory_space<vmem>>, %arg17: memref<1x8x64xbf16, #tpu.memory_space<vmem>>) attributes {dimension_semantics = [#tpu.dimension_semantics<parallel>], iteration_bounds = array<i64: 2>, scalar_prefetch = 0 : i64, scratch_operands = 0 : i64, tpu.core_type = #tpu.core_type<tc>, window_params = [{transform_indices = @transform_0, window_bounds = array<i64: 1, 1, 8>}, {transform_indices = @transform_1, window_bounds = array<i64: 1, 8, 64>}, {transform_indices = @transform_2, window_bounds = array<i64: 1, 1, 64>}, {pipeline_mode = #tpu.pipeline_mode<synchronous>, transform_indices = @transform_3, window_bounds = array<i64: 8, 8>}, {pipeline_mode = #tpu.pipeline_mode<synchronous>, transform_indices = @transform_4, window_bounds = array<i64: 64, 256>}, {pipeline_mode = #tpu.pipeline_mode<synchronous>, transform_indices = @transform_5, window_bounds = array<i64: 1, 256>}, {pipeline_mode = #tpu.pipeline_mode<synchronous>, transform_indices = @transform_6, window_bounds = array<i64: 64, 256>}, {pipeline_mode = #tpu.pipeline_mode<synchronous>, transform_indices = @transform_7, window_bounds = array<i64: 1, 256>}, {pipeline_mode = #tpu.pipeline_mode<synchronous>, transform_indices = @transform_8, window_bounds = array<i64: 8, 64>}, {pipeline_mode = #tpu.pipeline_mode<synchronous>, transform_indices = @transform_9, window_bounds = array<i64: 8, 64>}, {pipeline_mode = #tpu.pipeline_mode<synchronous>, transform_indices = @transform_10, window_bounds = array<i64: 64, 64>}, {pipeline_mode = #tpu.pipeline_mode<synchronous>, transform_indices = @transform_11, window_bounds = array<i64: 1, 64>}, {pipeline_mode = #tpu.pipeline_mode<synchronous>, transform_indices = @transform_12, window_bounds = array<i64: 1, 64>}, {pipeline_mode = #tpu.pipeline_mode<synchronous>, transform_indices = @transform_13, window_bounds = array<i64: 1, 64>}, {transform_indices = @transform_14, window_bounds = array<i64: 1, 2, 8, 8>}, {transform_indices = @transform_15, window_bounds = array<i64: 1, 8, 64>}, {transform_indices = @transform_16, window_bounds = array<i64: 1, 8, 64>}]} {
    %c0 = arith.constant 0 : index
    %c0_0 = arith.constant 0 : index
    %c0_1 = arith.constant 0 : index
    %0 = vector.load %arg1[%c0, %c0_0, %c0_1] : memref<1x1x8xf32, #tpu.memory_space<vmem>>, vector<1x1x8xf32>
    %1 = vector.shape_cast %0 : vector<1x1x8xf32> to vector<1x8xf32>
    %c0_2 = arith.constant 0 : index
    %c0_3 = arith.constant 0 : index
    %c0_4 = arith.constant 0 : index
    %2 = vector.load %arg2[%c0_2, %c0_3, %c0_4] : memref<1x8x64xf32, #tpu.memory_space<vmem>>, vector<1x8x64xf32>
    %3 = vector.shape_cast %2 : vector<1x8x64xf32> to vector<8x64xf32>
    %c0_5 = arith.constant 0 : index
    %c0_6 = arith.constant 0 : index
    %c0_7 = arith.constant 0 : index
    %4 = vector.load %arg3[%c0_5, %c0_6, %c0_7] : memref<1x1x64xf32, #tpu.memory_space<vmem>>, vector<1x1x64xf32>
    %5 = vector.shape_cast %4 : vector<1x1x64xf32> to vector<1x64xf32>
    %6 = vector.broadcast %5 : vector<1x64xf32> to vector<8x64xf32>
    %7 = arith.addf %3, %6 : vector<8x64xf32>
    %8 = arith.truncf %7 : vector<8x64xf32> to vector<8x64xbf16>
    %c0_8 = arith.constant 0 : index
    %c0_9 = arith.constant 0 : index
    %9 = vector.load %arg5[%c0_8, %c0_9] : memref<64x256xbf16, #tpu.memory_space<vmem>>, vector<64x256xbf16>
    %cst = arith.constant dense<0.000000e+00> : vector<8x256xf32>
    %10 = tpu.matmul %8, %9, %cst {dimension_numbers = #tpu.dot_dimension_numbers<[1], [0], [0], [1], [0, 0, 1, 1], [], []>} : vector<8x64xbf16>, vector<64x256xbf16>, vector<8x256xf32> -> vector<8x256xf32>
    %c0_10 = arith.constant 0 : index
    %c0_11 = arith.constant 0 : index
    %11 = vector.load %arg6[%c0_10, %c0_11] : memref<1x256xf32, #tpu.memory_space<vmem>>, vector<1x256xf32>
    %12 = vector.broadcast %11 : vector<1x256xf32> to vector<8x256xf32>
    %13 = arith.addf %10, %12 : vector<8x256xf32>
    %c0_12 = arith.constant 0 : index
    %c0_13 = arith.constant 0 : index
    %14 = vector.load %arg7[%c0_12, %c0_13] : memref<64x256xbf16, #tpu.memory_space<vmem>>, vector<64x256xbf16>
    %cst_14 = arith.constant dense<0.000000e+00> : vector<8x256xf32>
    %15 = tpu.matmul %8, %14, %cst_14 {dimension_numbers = #tpu.dot_dimension_numbers<[1], [0], [0], [1], [0, 0, 1, 1], [], []>} : vector<8x64xbf16>, vector<64x256xbf16>, vector<8x256xf32> -> vector<8x256xf32>
    %c0_15 = arith.constant 0 : index
    %c0_16 = arith.constant 0 : index
    %16 = vector.load %arg8[%c0_15, %c0_16] : memref<1x256xf32, #tpu.memory_space<vmem>>, vector<1x256xf32>
    %17 = vector.broadcast %16 : vector<1x256xf32> to vector<8x256xf32>
    %18 = arith.addf %15, %17 : vector<8x256xf32>
    %c0_17 = arith.constant 0 : index
    %c0_18 = arith.constant 0 : index
    %19 = vector.load %arg9[%c0_17, %c0_18] : memref<8x64xf32, #tpu.memory_space<vmem>>, vector<8x64xf32>
    %c0_19 = arith.constant 0 : index
    %c0_20 = arith.constant 0 : index
    %20 = vector.load %arg10[%c0_19, %c0_20] : memref<8x64xf32, #tpu.memory_space<vmem>>, vector<8x64xf32>
    %cst_21 = arith.constant 1.000000e+00 : f32
    %21 = vector.broadcast %cst_21 : f32 to vector<1x8xf32>
    %22 = arith.subf %1, %21 : vector<1x8xf32>
    %cst_22 = arith.constant 1.250000e+11 : f32
    %23 = vector.broadcast %cst_22 : f32 to vector<1x8xf32>
    %24 = arith.mulf %22, %23 : vector<1x8xf32>
    %c0_23 = arith.constant 0 : index
    %c0_24 = arith.constant 0 : index
    %25 = vector.load %arg4[%c0_23, %c0_24] : memref<8x8xf32, #tpu.memory_space<vmem>>, vector<8x8xf32>
    %26 = vector.broadcast %24 : vector<1x8xf32> to vector<8x8xf32>
    %27 = arith.subf %26, %25 : vector<8x8xf32>
    %cst_25 = arith.constant 1.250000e-01 : f32
    %28 = vector.broadcast %cst_25 : f32 to vector<1x8xf32>
    %29 = arith.mulf %1, %28 : vector<1x8xf32>
    %30 = vector.extract_strided_slice %13 {offsets = [0, 0], sizes = [8, 64], strides = [1, 1]} : vector<8x256xf32> to vector<8x64xf32>
    %31 = arith.mulf %30, %19 : vector<8x64xf32>
    %32 = vector.extract_strided_slice %18 {offsets = [0, 0], sizes = [8, 64], strides = [1, 1]} : vector<8x256xf32> to vector<8x64xf32>
    %33 = arith.mulf %32, %20 : vector<8x64xf32>
    %34 = arith.addf %31, %33 : vector<8x64xf32>
    %35 = vector.extract_strided_slice %13 {offsets = [0, 64], sizes = [8, 64], strides = [1, 1]} : vector<8x256xf32> to vector<8x64xf32>
    %36 = arith.mulf %35, %19 : vector<8x64xf32>
    %37 = vector.extract_strided_slice %18 {offsets = [0, 64], sizes = [8, 64], strides = [1, 1]} : vector<8x256xf32> to vector<8x64xf32>
    %38 = arith.mulf %37, %20 : vector<8x64xf32>
    %39 = arith.addf %36, %38 : vector<8x64xf32>
    %40 = arith.truncf %34 : vector<8x64xf32> to vector<8x64xbf16>
    %41 = arith.truncf %39 : vector<8x64xf32> to vector<8x64xbf16>
    %cst_26 = arith.constant dense<0.000000e+00> : vector<8x8xf32>
    %42 = tpu.matmul %40, %41, %cst_26 {dimension_numbers = #tpu.dot_dimension_numbers<[1], [1], [0], [0], [0, 0, 1, 0], [], []>} : vector<8x64xbf16>, vector<8x64xbf16>, vector<8x8xf32> -> vector<8x8xf32>
    %43 = vector.broadcast %29 : vector<1x8xf32> to vector<8x8xf32>
    %44 = arith.mulf %42, %43 : vector<8x8xf32>
    %45 = arith.addf %44, %27 : vector<8x8xf32>
    %c0_27 = arith.constant 0 : index
    %c0_28 = arith.constant 0 : index
    %c0_29 = arith.constant 0 : index
    %c0_30 = arith.constant 0 : index
    %46 = vector.load %arg15[%c0_27, %c0_28, %c0_29, %c0_30] : memref<1x2x8x8xf32, #tpu.memory_space<vmem>>, vector<1x1x8x8xf32>
    %47 = vector.shape_cast %46 : vector<1x1x8x8xf32> to vector<8x8xf32>
    %48 = vector.shape_cast %45 : vector<8x8xf32> to vector<1x1x8x8xf32>
    tpu.vector_store %arg15[%c0_27, %c0_28, %c0_29, %c0_30], %48 {strides = array<i32>} : memref<1x2x8x8xf32, #tpu.memory_space<vmem>>, vector<1x1x8x8xf32>,
    %cst_31 = arith.constant -1.250000e+11 : f32
    %49 = vector.broadcast %cst_31 : f32 to vector<8x8xf32>
    %50 = arith.cmpf oeq, %45, %49 : vector<8x8xf32>
    %cst_32 = arith.constant 0.000000e+00 : f32
    %51 = vector.broadcast %cst_32 : f32 to vector<8x8xf32>
    %52 = arith.select %50, %51, %45 : vector<8x8xi1>, vector<8x8xf32>
    %cst_33 = arith.constant -2.500000e+11 : f32
    %53 = vector.broadcast %cst_33 : f32 to vector<8x8xf32>
    %54 = arith.cmpf oeq, %52, %53 : vector<8x8xf32>
    %cst_34 = arith.constant 0.000000e+00 : f32
    %55 = vector.broadcast %cst_34 : f32 to vector<8x8xf32>
    %56 = arith.select %54, %55, %52 : vector<8x8xi1>, vector<8x8xf32>
    %57 = vector.extract_strided_slice %13 {offsets = [0, 128], sizes = [8, 64], strides = [1, 1]} : vector<8x256xf32> to vector<8x64xf32>
    %58 = arith.mulf %57, %19 : vector<8x64xf32>
    %59 = vector.extract_strided_slice %18 {offsets = [0, 128], sizes = [8, 64], strides = [1, 1]} : vector<8x256xf32> to vector<8x64xf32>
    %60 = arith.mulf %59, %20 : vector<8x64xf32>
    %61 = arith.addf %58, %60 : vector<8x64xf32>
    %62 = vector.extract_strided_slice %13 {offsets = [0, 192], sizes = [8, 64], strides = [1, 1]} : vector<8x256xf32> to vector<8x64xf32>
    %63 = arith.mulf %62, %19 : vector<8x64xf32>
    %64 = vector.extract_strided_slice %18 {offsets = [0, 192], sizes = [8, 64], strides = [1, 1]} : vector<8x256xf32> to vector<8x64xf32>
    %65 = arith.mulf %64, %20 : vector<8x64xf32>
    %66 = arith.addf %63, %65 : vector<8x64xf32>
    %67 = arith.truncf %61 : vector<8x64xf32> to vector<8x64xbf16>
    %68 = arith.truncf %66 : vector<8x64xf32> to vector<8x64xbf16>
    %cst_35 = arith.constant dense<0.000000e+00> : vector<8x8xf32>
    %69 = tpu.matmul %67, %68, %cst_35 {dimension_numbers = #tpu.dot_dimension_numbers<[1], [1], [0], [0], [0, 0, 1, 0], [], []>} : vector<8x64xbf16>, vector<8x64xbf16>, vector<8x8xf32> -> vector<8x8xf32>
    %70 = vector.broadcast %29 : vector<1x8xf32> to vector<8x8xf32>
    %71 = arith.mulf %69, %70 : vector<8x8xf32>
    %72 = arith.addf %71, %27 : vector<8x8xf32>
    %c0_36 = arith.constant 0 : index
    %c1 = arith.constant 1 : index
    %c0_37 = arith.constant 0 : index
    %c0_38 = arith.constant 0 : index
    %73 = vector.load %arg15[%c0_36, %c1, %c0_37, %c0_38] : memref<1x2x8x8xf32, #tpu.memory_space<vmem>>, vector<1x1x8x8xf32>
    %74 = vector.shape_cast %73 : vector<1x1x8x8xf32> to vector<8x8xf32>
    %75 = vector.shape_cast %72 : vector<8x8xf32> to vector<1x1x8x8xf32>
    tpu.vector_store %arg15[%c0_36, %c1, %c0_37, %c0_38], %75 {strides = array<i32>} : memref<1x2x8x8xf32, #tpu.memory_space<vmem>>, vector<1x1x8x8xf32>,
    %cst_39 = arith.constant -1.250000e+11 : f32
    %76 = vector.broadcast %cst_39 : f32 to vector<8x8xf32>
    %77 = arith.cmpf oeq, %72, %76 : vector<8x8xf32>
    %cst_40 = arith.constant 0.000000e+00 : f32
    %78 = vector.broadcast %cst_40 : f32 to vector<8x8xf32>
    %79 = arith.select %77, %78, %72 : vector<8x8xi1>, vector<8x8xf32>
    %cst_41 = arith.constant -2.500000e+11 : f32
    %80 = vector.broadcast %cst_41 : f32 to vector<8x8xf32>
    %81 = arith.cmpf oeq, %79, %80 : vector<8x8xf32>
    %cst_42 = arith.constant 0.000000e+00 : f32
    %82 = vector.broadcast %cst_42 : f32 to vector<8x8xf32>
    %83 = arith.select %81, %82, %79 : vector<8x8xi1>, vector<8x8xf32>
    %84 = arith.addf %56, %83 : vector<8x8xf32>
    %cst_43 = arith.constant 1.000000e+00 : f32
    %85 = vector.broadcast %cst_43 : f32 to vector<8x1xf32>
    %cst_44 = arith.constant dense<0.000000e+00> : vector<8x1xf32>
    %86 = tpu.matmul %84, %85, %cst_44 {dimension_numbers = #tpu.dot_dimension_numbers<[0], [0], [1], [1], [0, 1, 1, 1], [], []>} : vector<8x8xf32>, vector<8x1xf32>, vector<8x1xf32> -> vector<8x1xf32>
    %cst_45 = arith.constant dense<0.000000e+00> : vector<8xf32>
    %87 = vector.multi_reduction <add>, %84, %cst_45 [1] : vector<8x8xf32> to vector<8xf32>
    %88 = vector.shape_cast %87 : vector<8xf32> to vector<8x1xf32>
    %c0_46 = arith.constant 0 : index
    %c0_47 = arith.constant 0 : index
    %89 = vector.load %arg11[%c0_46, %c0_47] : memref<64x64xbf16, #tpu.memory_space<vmem>>, vector<64x64xbf16>
    %c0_48 = arith.constant 0 : index
    %c0_49 = arith.constant 0 : index
    %90 = vector.load %arg12[%c0_48, %c0_49] : memref<1x64xf32, #tpu.memory_space<vmem>>, vector<1x64xf32>
    %c0_50 = arith.constant 0 : index
    %c0_51 = arith.constant 0 : index
    %91 = vector.load %arg13[%c0_50, %c0_51] : memref<1x64xf32, #tpu.memory_space<vmem>>, vector<1x64xf32>
    %c0_52 = arith.constant 0 : index
    %c0_53 = arith.constant 0 : index
    %92 = vector.load %arg14[%c0_52, %c0_53] : memref<1x64xf32, #tpu.memory_space<vmem>>, vector<1x64xf32>
    %93 = arith.negf %86 : vector<8x1xf32>
    %94 = math.exp %93 : vector<8x1xf32>
    %cst_54 = arith.constant 1.000000e+00 : f32
    %95 = vector.broadcast %cst_54 : f32 to vector<8x1xf32>
    %96 = arith.addf %95, %94 : vector<8x1xf32>
    %97 = arith.divf %95, %96 : vector<8x1xf32>
    %cst_55 = arith.constant 5.000000e-01 : f32
    %98 = vector.broadcast %cst_55 : f32 to vector<8x1xf32>
    %99 = arith.cmpf oeq, %97, %98 : vector<8x1xf32>
    %cst_56 = arith.constant 0.000000e+00 : f32
    %100 = vector.broadcast %cst_56 : f32 to vector<8x1xf32>
    %101 = arith.select %99, %100, %97 : vector<8x1xi1>, vector<8x1xf32>
    %102 = vector.broadcast %101 : vector<8x1xf32> to vector<8x64xf32>
    %103 = arith.mulf %102, %3 : vector<8x64xf32>
    %104 = arith.truncf %103 : vector<8x64xf32> to vector<8x64xbf16>
    %cst_57 = arith.constant dense<0.000000e+00> : vector<8x64xf32>
    %105 = tpu.matmul %104, %89, %cst_57 {dimension_numbers = #tpu.dot_dimension_numbers<[1], [0], [0], [1], [0, 0, 1, 1], [], []>} : vector<8x64xbf16>, vector<64x64xbf16>, vector<8x64xf32> -> vector<8x64xf32>
    %106 = vector.broadcast %90 : vector<1x64xf32> to vector<8x64xf32>
    %107 = arith.addf %105, %106 : vector<8x64xf32>
    %108 = arith.addf %107, %3 : vector<8x64xf32>
    %cst_58 = arith.constant dense<0.000000e+00> : vector<8xf32>
    %109 = vector.multi_reduction <add>, %108, %cst_58 [1] : vector<8x64xf32> to vector<8xf32>
    %110 = vector.shape_cast %109 : vector<8xf32> to vector<8x1xf32>
    %cst_59 = arith.constant 6.400000e+01 : f32
    %111 = vector.broadcast %cst_59 : f32 to vector<8x1xf32>
    %112 = arith.divf %110, %111 : vector<8x1xf32>
    %113 = vector.broadcast %112 : vector<8x1xf32> to vector<8x64xf32>
    %114 = arith.subf %108, %113 : vector<8x64xf32>
    %115 = arith.mulf %114, %114 : vector<8x64xf32>
    %cst_60 = arith.constant dense<0.000000e+00> : vector<8xf32>
    %116 = vector.multi_reduction <add>, %115, %cst_60 [1] : vector<8x64xf32> to vector<8xf32>
    %117 = vector.shape_cast %116 : vector<8xf32> to vector<8x1xf32>
    %cst_61 = arith.constant 6.400000e+01 : f32
    %118 = vector.broadcast %cst_61 : f32 to vector<8x1xf32>
    %119 = arith.divf %117, %118 : vector<8x1xf32>
    %120 = vector.broadcast %112 : vector<8x1xf32> to vector<8x64xf32>
    %121 = arith.subf %108, %120 : vector<8x64xf32>
    %cst_62 = arith.constant 9.99999974E-6 : f32
    %122 = vector.broadcast %cst_62 : f32 to vector<8x1xf32>
    %123 = arith.addf %119, %122 : vector<8x1xf32>
    %124 = math.rsqrt %123 : vector<8x1xf32>
    %125 = vector.broadcast %124 : vector<8x1xf32> to vector<8x64xf32>
    %126 = arith.mulf %121, %125 : vector<8x64xf32>
    %127 = vector.broadcast %91 : vector<1x64xf32> to vector<8x64xf32>
    %128 = arith.mulf %126, %127 : vector<8x64xf32>
    %129 = vector.broadcast %92 : vector<1x64xf32> to vector<8x64xf32>
    %130 = arith.addf %128, %129 : vector<8x64xf32>
    %131 = arith.truncf %130 : vector<8x64xf32> to vector<8x64xbf16>
    %c0_63 = arith.constant 0 : index
    %c0_64 = arith.constant 0 : index
    %c0_65 = arith.constant 0 : index
    %132 = vector.load %arg16[%c0_63, %c0_64, %c0_65] : memref<1x8x64xbf16, #tpu.memory_space<vmem>>, vector<1x8x64xbf16>
    %133 = vector.shape_cast %132 : vector<1x8x64xbf16> to vector<8x64xbf16>
    %134 = vector.shape_cast %131 : vector<8x64xbf16> to vector<1x8x64xbf16>
    tpu.vector_store %arg16[%c0_63, %c0_64, %c0_65], %134 {strides = array<i32>} : memref<1x8x64xbf16, #tpu.memory_space<vmem>>, vector<1x8x64xbf16>,
    %135 = arith.negf %88 : vector<8x1xf32>
    %136 = math.exp %135 : vector<8x1xf32>
    %cst_66 = arith.constant 1.000000e+00 : f32
    %137 = vector.broadcast %cst_66 : f32 to vector<8x1xf32>
    %138 = arith.addf %137, %136 : vector<8x1xf32>
    %139 = arith.divf %137, %138 : vector<8x1xf32>
    %cst_67 = arith.constant 5.000000e-01 : f32
    %140 = vector.broadcast %cst_67 : f32 to vector<8x1xf32>
    %141 = arith.cmpf oeq, %139, %140 : vector<8x1xf32>
    %cst_68 = arith.constant 0.000000e+00 : f32
    %142 = vector.broadcast %cst_68 : f32 to vector<8x1xf32>
    %143 = arith.select %141, %142, %139 : vector<8x1xi1>, vector<8x1xf32>
    %144 = vector.broadcast %143 : vector<8x1xf32> to vector<8x64xf32>
    %145 = arith.mulf %144, %3 : vector<8x64xf32>
    %146 = arith.truncf %145 : vector<8x64xf32> to vector<8x64xbf16>
    %cst_69 = arith.constant dense<0.000000e+00> : vector<8x64xf32>
    %147 = tpu.matmul %146, %89, %cst_69 {dimension_numbers = #tpu.dot_dimension_numbers<[1], [0], [0], [1], [0, 0, 1, 1], [], []>} : vector<8x64xbf16>, vector<64x64xbf16>, vector<8x64xf32> -> vector<8x64xf32>
    %148 = vector.broadcast %90 : vector<1x64xf32> to vector<8x64xf32>
    %149 = arith.addf %147, %148 : vector<8x64xf32>
    %150 = arith.addf %149, %3 : vector<8x64xf32>
    %cst_70 = arith.constant dense<0.000000e+00> : vector<8xf32>
    %151 = vector.multi_reduction <add>, %150, %cst_70 [1] : vector<8x64xf32> to vector<8xf32>
    %152 = vector.shape_cast %151 : vector<8xf32> to vector<8x1xf32>
    %cst_71 = arith.constant 6.400000e+01 : f32
    %153 = vector.broadcast %cst_71 : f32 to vector<8x1xf32>
    %154 = arith.divf %152, %153 : vector<8x1xf32>
    %155 = vector.broadcast %154 : vector<8x1xf32> to vector<8x64xf32>
    %156 = arith.subf %150, %155 : vector<8x64xf32>
    %157 = arith.mulf %156, %156 : vector<8x64xf32>
    %cst_72 = arith.constant dense<0.000000e+00> : vector<8xf32>
    %158 = vector.multi_reduction <add>, %157, %cst_72 [1] : vector<8x64xf32> to vector<8xf32>
    %159 = vector.shape_cast %158 : vector<8xf32> to vector<8x1xf32>
    %cst_73 = arith.constant 6.400000e+01 : f32
    %160 = vector.broadcast %cst_73 : f32 to vector<8x1xf32>
    %161 = arith.divf %159, %160 : vector<8x1xf32>
    %162 = vector.broadcast %154 : vector<8x1xf32> to vector<8x64xf32>
    %163 = arith.subf %150, %162 : vector<8x64xf32>
    %cst_74 = arith.constant 9.99999974E-6 : f32
    %164 = vector.broadcast %cst_74 : f32 to vector<8x1xf32>
    %165 = arith.addf %161, %164 : vector<8x1xf32>
    %166 = math.rsqrt %165 : vector<8x1xf32>
    %167 = vector.broadcast %166 : vector<8x1xf32> to vector<8x64xf32>
    %168 = arith.mulf %163, %167 : vector<8x64xf32>
    %169 = vector.broadcast %91 : vector<1x64xf32> to vector<8x64xf32>
    %170 = arith.mulf %168, %169 : vector<8x64xf32>
    %171 = vector.broadcast %92 : vector<1x64xf32> to vector<8x64xf32>
    %172 = arith.addf %170, %171 : vector<8x64xf32>
    %173 = arith.truncf %172 : vector<8x64xf32> to vector<8x64xbf16>
    %c0_75 = arith.constant 0 : index
    %c0_76 = arith.constant 0 : index
    %c0_77 = arith.constant 0 : index
    %174 = vector.load %arg17[%c0_75, %c0_76, %c0_77] : memref<1x8x64xbf16, #tpu.memory_space<vmem>>, vector<1x8x64xbf16>
    %175 = vector.shape_cast %174 : vector<1x8x64xbf16> to vector<8x64xbf16>
    %176 = vector.shape_cast %173 : vector<8x64xbf16> to vector<1x8x64xbf16>
    tpu.vector_store %arg17[%c0_75, %c0_76, %c0_77], %176 {strides = array<i32>} : memref<1x8x64xbf16, #tpu.memory_space<vmem>>, vector<1x8x64xbf16>,
    return
  }
  func.func @transform_0(%arg0: i32) -> (i32, i32, i32) {
    %c0_i32 = arith.constant 0 : i32
    %c0_i32_0 = arith.constant 0 : i32
    %c0_i32_1 = arith.constant 0 : i32
    return %arg0, %c0_i32, %c0_i32_0 : i32, i32, i32
  }
  func.func @transform_1(%arg0: i32) -> (i32, i32, i32) {
    %c0_i32 = arith.constant 0 : i32
    %c0_i32_0 = arith.constant 0 : i32
    %c0_i32_1 = arith.constant 0 : i32
    return %arg0, %c0_i32, %c0_i32_0 : i32, i32, i32
  }
  func.func @transform_2(%arg0: i32) -> (i32, i32, i32) {
    %c0_i32 = arith.constant 0 : i32
    %c0_i32_0 = arith.constant 0 : i32
    %c0_i32_1 = arith.constant 0 : i32
    return %arg0, %c0_i32, %c0_i32_0 : i32, i32, i32
  }
  func.func @transform_3(%arg0: i32) -> (i32, i32) {
    %c0_i32 = arith.constant 0 : i32
    %c0_i32_0 = arith.constant 0 : i32
    %c0_i32_1 = arith.constant 0 : i32
    return %c0_i32, %c0_i32_0 : i32, i32
  }
  func.func @transform_4(%arg0: i32) -> (i32, i32) {
    %c0_i32 = arith.constant 0 : i32
    %c0_i32_0 = arith.constant 0 : i32
    %c0_i32_1 = arith.constant 0 : i32
    return %c0_i32, %c0_i32_0 : i32, i32
  }
  func.func @transform_5(%arg0: i32) -> (i32, i32) {
    %c0_i32 = arith.constant 0 : i32
    %c0_i32_0 = arith.constant 0 : i32
    %c0_i32_1 = arith.constant 0 : i32
    return %c0_i32, %c0_i32_0 : i32, i32
  }
  func.func @transform_6(%arg0: i32) -> (i32, i32) {
    %c0_i32 = arith.constant 0 : i32
    %c0_i32_0 = arith.constant 0 : i32
    %c0_i32_1 = arith.constant 0 : i32
    return %c0_i32, %c0_i32_0 : i32, i32
  }
  func.func @transform_7(%arg0: i32) -> (i32, i32) {
    %c0_i32 = arith.constant 0 : i32
    %c0_i32_0 = arith.constant 0 : i32
    %c0_i32_1 = arith.constant 0 : i32
    return %c0_i32, %c0_i32_0 : i32, i32
  }
  func.func @transform_8(%arg0: i32) -> (i32, i32) {
    %c0_i32 = arith.constant 0 : i32
    %c0_i32_0 = arith.constant 0 : i32
    %c0_i32_1 = arith.constant 0 : i32
    return %c0_i32, %c0_i32_0 : i32, i32
  }
  func.func @transform_9(%arg0: i32) -> (i32, i32) {
    %c0_i32 = arith.constant 0 : i32
    %c0_i32_0 = arith.constant 0 : i32
    %c0_i32_1 = arith.constant 0 : i32
    return %c0_i32, %c0_i32_0 : i32, i32
  }
  func.func @transform_10(%arg0: i32) -> (i32, i32) {
    %c0_i32 = arith.constant 0 : i32
    %c0_i32_0 = arith.constant 0 : i32
    %c0_i32_1 = arith.constant 0 : i32
    return %c0_i32, %c0_i32_0 : i32, i32
  }
  func.func @transform_11(%arg0: i32) -> (i32, i32) {
    %c0_i32 = arith.constant 0 : i32
    %c0_i32_0 = arith.constant 0 : i32
    %c0_i32_1 = arith.constant 0 : i32
    return %c0_i32, %c0_i32_0 : i32, i32
  }
  func.func @transform_12(%arg0: i32) -> (i32, i32) {
    %c0_i32 = arith.constant 0 : i32
    %c0_i32_0 = arith.constant 0 : i32
    %c0_i32_1 = arith.constant 0 : i32
    return %c0_i32, %c0_i32_0 : i32, i32
  }
  func.func @transform_13(%arg0: i32) -> (i32, i32) {
    %c0_i32 = arith.constant 0 : i32
    %c0_i32_0 = arith.constant 0 : i32
    %c0_i32_1 = arith.constant 0 : i32
    return %c0_i32, %c0_i32_0 : i32, i32
  }
  func.func @transform_14(%arg0: i32) -> (i32, i32, i32, i32) {
    %c0_i32 = arith.constant 0 : i32
    %c0_i32_0 = arith.constant 0 : i32
    %c0_i32_1 = arith.constant 0 : i32
    %c0_i32_2 = arith.constant 0 : i32
    return %arg0, %c0_i32, %c0_i32_0, %c0_i32_1 : i32, i32, i32, i32
  }
  func.func @transform_15(%arg0: i32) -> (i32, i32, i32) {
    %c0_i32 = arith.constant 0 : i32
    %c0_i32_0 = arith.constant 0 : i32
    %c0_i32_1 = arith.constant 0 : i32
    return %arg0, %c0_i32, %c0_i32_0 : i32, i32, i32
  }
  func.func @transform_16(%arg0: i32) -> (i32, i32, i32) {
    %c0_i32 = arith.constant 0 : i32
    %c0_i32_0 = arith.constant 0 : i32
    %c0_i32_1 = arith.constant 0 : i32
    return %arg0, %c0_i32, %c0_i32_0 : i32, i32, i32
  }
}

module attributes {stable_mosaic.version = 11 : i64} {
  func.func @_gp_plain_kernel(%arg0: i32, %arg1: i32, %arg2: memref<1x1x8xf32, #tpu.memory_space<vmem>>, %arg3: memref<1x8x64xbf16, #tpu.memory_space<vmem>>, %arg4: memref<512x64xbf16, #tpu.memory_space<vmem>>, %arg5: memref<1x512xf32, #tpu.memory_space<vmem>>, %arg6: memref<1x4x8x8xf32, #tpu.memory_space<vmem>>) attributes {dimension_semantics = [#tpu.dimension_semantics<parallel>, #tpu.dimension_semantics<parallel>], iteration_bounds = array<i64: 2, 1>, scalar_prefetch = 0 : i64, scratch_operands = 0 : i64, tpu.core_type = #tpu.core_type<tc>, window_params = [{transform_indices = @transform_0, window_bounds = array<i64: 1, 1, 8>}, {transform_indices = @transform_1, window_bounds = array<i64: 1, 8, 64>}, {pipeline_mode = #tpu.pipeline_mode<synchronous>, transform_indices = @transform_2, window_bounds = array<i64: 512, 64>}, {transform_indices = @transform_3, window_bounds = array<i64: 1, 512>}, {transform_indices = @transform_4, window_bounds = array<i64: 1, 4, 8, 8>}]} {
    %c0 = arith.constant 0 : index
    %c0_0 = arith.constant 0 : index
    %c0_1 = arith.constant 0 : index
    %0 = vector.load %arg2[%c0, %c0_0, %c0_1] : memref<1x1x8xf32, #tpu.memory_space<vmem>>, vector<1x1x8xf32>
    %1 = vector.shape_cast %0 : vector<1x1x8xf32> to vector<1x8xf32>
    %c0_2 = arith.constant 0 : index
    %c0_3 = arith.constant 0 : index
    %c0_4 = arith.constant 0 : index
    %2 = vector.load %arg3[%c0_2, %c0_3, %c0_4] : memref<1x8x64xbf16, #tpu.memory_space<vmem>>, vector<1x8x64xbf16>
    %3 = vector.shape_cast %2 : vector<1x8x64xbf16> to vector<8x64xbf16>
    %c512_i32 = arith.constant 512 : i32
    %4 = arith.muli %arg1, %c512_i32 : i32
    %5 = tpu.assume_multiple %4, 512 : i32
    %6 = arith.index_cast %5 : i32 to index
    %c0_5 = arith.constant 0 : index
    %7 = vector.load %arg4[%6, %c0_5] : memref<512x64xbf16, #tpu.memory_space<vmem>>, vector<512x64xbf16>
    %cst = arith.constant dense<0.000000e+00> : vector<8x512xf32>
    %8 = tpu.matmul %3, %7, %cst {dimension_numbers = #tpu.dot_dimension_numbers<[1], [1], [0], [0], [0, 0, 1, 0], [], []>} : vector<8x64xbf16>, vector<512x64xbf16>, vector<8x512xf32> -> vector<8x512xf32>
    %c0_6 = arith.constant 0 : index
    %c0_7 = arith.constant 0 : index
    %9 = vector.load %arg5[%c0_6, %c0_7] : memref<1x512xf32, #tpu.memory_space<vmem>>, vector<1x512xf32>
    %10 = vector.broadcast %9 : vector<1x512xf32> to vector<8x512xf32>
    %11 = arith.addf %8, %10 : vector<8x512xf32>
    %cst_8 = arith.constant 1.000000e+00 : f32
    %12 = vector.broadcast %cst_8 : f32 to vector<1x8xf32>
    %13 = arith.subf %1, %12 : vector<1x8xf32>
    %cst_9 = arith.constant 1.250000e+11 : f32
    %14 = vector.broadcast %cst_9 : f32 to vector<1x8xf32>
    %15 = arith.mulf %13, %14 : vector<1x8xf32>
    %cst_10 = arith.constant 1.250000e-01 : f32
    %16 = vector.broadcast %cst_10 : f32 to vector<1x8xf32>
    %17 = arith.mulf %1, %16 : vector<1x8xf32>
    %18 = vector.extract_strided_slice %11 {offsets = [0, 0], sizes = [8, 64], strides = [1, 1]} : vector<8x512xf32> to vector<8x64xf32>
    %19 = arith.truncf %18 : vector<8x64xf32> to vector<8x64xbf16>
    %20 = vector.extract_strided_slice %11 {offsets = [0, 64], sizes = [8, 64], strides = [1, 1]} : vector<8x512xf32> to vector<8x64xf32>
    %21 = arith.truncf %20 : vector<8x64xf32> to vector<8x64xbf16>
    %cst_11 = arith.constant dense<0.000000e+00> : vector<8x8xf32>
    %22 = tpu.matmul %19, %21, %cst_11 {dimension_numbers = #tpu.dot_dimension_numbers<[1], [1], [0], [0], [0, 0, 1, 0], [], []>} : vector<8x64xbf16>, vector<8x64xbf16>, vector<8x8xf32> -> vector<8x8xf32>
    %23 = vector.broadcast %17 : vector<1x8xf32> to vector<8x8xf32>
    %24 = arith.mulf %22, %23 : vector<8x8xf32>
    %25 = vector.broadcast %15 : vector<1x8xf32> to vector<8x8xf32>
    %26 = arith.addf %24, %25 : vector<8x8xf32>
    %c0_12 = arith.constant 0 : index
    %c0_13 = arith.constant 0 : index
    %c0_14 = arith.constant 0 : index
    %c0_15 = arith.constant 0 : index
    %27 = vector.load %arg6[%c0_12, %c0_13, %c0_14, %c0_15] : memref<1x4x8x8xf32, #tpu.memory_space<vmem>>, vector<1x1x8x8xf32>
    %28 = vector.shape_cast %27 : vector<1x1x8x8xf32> to vector<8x8xf32>
    %29 = vector.shape_cast %26 : vector<8x8xf32> to vector<1x1x8x8xf32>
    tpu.vector_store %arg6[%c0_12, %c0_13, %c0_14, %c0_15], %29 {strides = array<i32>} : memref<1x4x8x8xf32, #tpu.memory_space<vmem>>, vector<1x1x8x8xf32>,
    %30 = vector.extract_strided_slice %11 {offsets = [0, 128], sizes = [8, 64], strides = [1, 1]} : vector<8x512xf32> to vector<8x64xf32>
    %31 = arith.truncf %30 : vector<8x64xf32> to vector<8x64xbf16>
    %32 = vector.extract_strided_slice %11 {offsets = [0, 192], sizes = [8, 64], strides = [1, 1]} : vector<8x512xf32> to vector<8x64xf32>
    %33 = arith.truncf %32 : vector<8x64xf32> to vector<8x64xbf16>
    %cst_16 = arith.constant dense<0.000000e+00> : vector<8x8xf32>
    %34 = tpu.matmul %31, %33, %cst_16 {dimension_numbers = #tpu.dot_dimension_numbers<[1], [1], [0], [0], [0, 0, 1, 0], [], []>} : vector<8x64xbf16>, vector<8x64xbf16>, vector<8x8xf32> -> vector<8x8xf32>
    %35 = vector.broadcast %17 : vector<1x8xf32> to vector<8x8xf32>
    %36 = arith.mulf %34, %35 : vector<8x8xf32>
    %37 = vector.broadcast %15 : vector<1x8xf32> to vector<8x8xf32>
    %38 = arith.addf %36, %37 : vector<8x8xf32>
    %c0_17 = arith.constant 0 : index
    %c1 = arith.constant 1 : index
    %c0_18 = arith.constant 0 : index
    %c0_19 = arith.constant 0 : index
    %39 = vector.load %arg6[%c0_17, %c1, %c0_18, %c0_19] : memref<1x4x8x8xf32, #tpu.memory_space<vmem>>, vector<1x1x8x8xf32>
    %40 = vector.shape_cast %39 : vector<1x1x8x8xf32> to vector<8x8xf32>
    %41 = vector.shape_cast %38 : vector<8x8xf32> to vector<1x1x8x8xf32>
    tpu.vector_store %arg6[%c0_17, %c1, %c0_18, %c0_19], %41 {strides = array<i32>} : memref<1x4x8x8xf32, #tpu.memory_space<vmem>>, vector<1x1x8x8xf32>,
    %42 = vector.extract_strided_slice %11 {offsets = [0, 256], sizes = [8, 64], strides = [1, 1]} : vector<8x512xf32> to vector<8x64xf32>
    %43 = arith.truncf %42 : vector<8x64xf32> to vector<8x64xbf16>
    %44 = vector.extract_strided_slice %11 {offsets = [0, 320], sizes = [8, 64], strides = [1, 1]} : vector<8x512xf32> to vector<8x64xf32>
    %45 = arith.truncf %44 : vector<8x64xf32> to vector<8x64xbf16>
    %cst_20 = arith.constant dense<0.000000e+00> : vector<8x8xf32>
    %46 = tpu.matmul %43, %45, %cst_20 {dimension_numbers = #tpu.dot_dimension_numbers<[1], [1], [0], [0], [0, 0, 1, 0], [], []>} : vector<8x64xbf16>, vector<8x64xbf16>, vector<8x8xf32> -> vector<8x8xf32>
    %47 = vector.broadcast %17 : vector<1x8xf32> to vector<8x8xf32>
    %48 = arith.mulf %46, %47 : vector<8x8xf32>
    %49 = vector.broadcast %15 : vector<1x8xf32> to vector<8x8xf32>
    %50 = arith.addf %48, %49 : vector<8x8xf32>
    %c0_21 = arith.constant 0 : index
    %c2 = arith.constant 2 : index
    %c0_22 = arith.constant 0 : index
    %c0_23 = arith.constant 0 : index
    %51 = vector.load %arg6[%c0_21, %c2, %c0_22, %c0_23] : memref<1x4x8x8xf32, #tpu.memory_space<vmem>>, vector<1x1x8x8xf32>
    %52 = vector.shape_cast %51 : vector<1x1x8x8xf32> to vector<8x8xf32>
    %53 = vector.shape_cast %50 : vector<8x8xf32> to vector<1x1x8x8xf32>
    tpu.vector_store %arg6[%c0_21, %c2, %c0_22, %c0_23], %53 {strides = array<i32>} : memref<1x4x8x8xf32, #tpu.memory_space<vmem>>, vector<1x1x8x8xf32>,
    %54 = vector.extract_strided_slice %11 {offsets = [0, 384], sizes = [8, 64], strides = [1, 1]} : vector<8x512xf32> to vector<8x64xf32>
    %55 = arith.truncf %54 : vector<8x64xf32> to vector<8x64xbf16>
    %56 = vector.extract_strided_slice %11 {offsets = [0, 448], sizes = [8, 64], strides = [1, 1]} : vector<8x512xf32> to vector<8x64xf32>
    %57 = arith.truncf %56 : vector<8x64xf32> to vector<8x64xbf16>
    %cst_24 = arith.constant dense<0.000000e+00> : vector<8x8xf32>
    %58 = tpu.matmul %55, %57, %cst_24 {dimension_numbers = #tpu.dot_dimension_numbers<[1], [1], [0], [0], [0, 0, 1, 0], [], []>} : vector<8x64xbf16>, vector<8x64xbf16>, vector<8x8xf32> -> vector<8x8xf32>
    %59 = vector.broadcast %17 : vector<1x8xf32> to vector<8x8xf32>
    %60 = arith.mulf %58, %59 : vector<8x8xf32>
    %61 = vector.broadcast %15 : vector<1x8xf32> to vector<8x8xf32>
    %62 = arith.addf %60, %61 : vector<8x8xf32>
    %c0_25 = arith.constant 0 : index
    %c3 = arith.constant 3 : index
    %c0_26 = arith.constant 0 : index
    %c0_27 = arith.constant 0 : index
    %63 = vector.load %arg6[%c0_25, %c3, %c0_26, %c0_27] : memref<1x4x8x8xf32, #tpu.memory_space<vmem>>, vector<1x1x8x8xf32>
    %64 = vector.shape_cast %63 : vector<1x1x8x8xf32> to vector<8x8xf32>
    %65 = vector.shape_cast %62 : vector<8x8xf32> to vector<1x1x8x8xf32>
    tpu.vector_store %arg6[%c0_25, %c3, %c0_26, %c0_27], %65 {strides = array<i32>} : memref<1x4x8x8xf32, #tpu.memory_space<vmem>>, vector<1x1x8x8xf32>,
    return
  }
  func.func @transform_0(%arg0: i32, %arg1: i32) -> (i32, i32, i32) {
    %c0_i32 = arith.constant 0 : i32
    %c0_i32_0 = arith.constant 0 : i32
    %c0_i32_1 = arith.constant 0 : i32
    return %arg0, %c0_i32, %c0_i32_0 : i32, i32, i32
  }
  func.func @transform_1(%arg0: i32, %arg1: i32) -> (i32, i32, i32) {
    %c0_i32 = arith.constant 0 : i32
    %c0_i32_0 = arith.constant 0 : i32
    %c0_i32_1 = arith.constant 0 : i32
    return %arg0, %c0_i32, %c0_i32_0 : i32, i32, i32
  }
  func.func @transform_2(%arg0: i32, %arg1: i32) -> (i32, i32) {
    %c0_i32 = arith.constant 0 : i32
    %c0_i32_0 = arith.constant 0 : i32
    %c0_i32_1 = arith.constant 0 : i32
    return %c0_i32, %c0_i32_0 : i32, i32
  }
  func.func @transform_3(%arg0: i32, %arg1: i32) -> (i32, i32) {
    %c0_i32 = arith.constant 0 : i32
    %c0_i32_0 = arith.constant 0 : i32
    return %c0_i32, %arg1 : i32, i32
  }
  func.func @transform_4(%arg0: i32, %arg1: i32) -> (i32, i32, i32, i32) {
    %c0_i32 = arith.constant 0 : i32
    %c0_i32_0 = arith.constant 0 : i32
    %c0_i32_1 = arith.constant 0 : i32
    return %arg0, %arg1, %c0_i32, %c0_i32_0 : i32, i32, i32, i32
  }
}

</mosaic_0001>

<llo_original>
// kernel: remodel_forward.5
$region0: #{remodel_forward.5}
  #allocation0 [shape = 'u32[]', space=smem, size = 0x4, offset = 0x4, fixed_abs, tag = 'smem constant byte address 0x4 - core index']
  #allocation1 [shape = 'u32[144,128]{1,0:T(1,128)}', space=vmem, size = 0x12000, scoped, tag = 'internal scratch']
  %s0 = inlined_call_operand.vmem [shape: f32[2,1,8], index: 0, kind: input, shape index: {}]
  %s1 = inlined_call_operand.vmem [shape: bf16[2,8,64], index: 1, kind: input, shape index: {}]
  %s2 = inlined_call_operand.vmem [shape: bf16[512,64], index: 2, kind: input, shape index: {}]
  %s3 = inlined_call_operand.vmem [shape: f32[1,512], index: 3, kind: input, shape index: {}]
  %s4 = inlined_call_operand.hbm [shape: f32[2,4,8,8], index: 4, kind: output, shape index: {}]
  %s5 = sld [smem:[#allocation0]]
  $region49: #{remodel_forward.5} parent=0
    _
  %s7 = ssub.s32 1, %s5
  %s8 = scalar_select 0, %s7, %s5
  $region1: #{remodel_forward.5} parent=0
    #allocation2 [shape = 'u8[32768]{0}', space=vmem, size = 0x8000, scoped, tag = 'output window, operand 0']
    #allocation3 [shape = 's32[2]{0}', space=sflag, size = 0x8, scoped, tag = 'scoped memory for remodel_forward.5']
    %9 = vsyncpa [#allocation3], 0
    %s10 = scalar_lea.sflag [#allocation3], 1
    %11 = vsyncpa %s10, 0
    loop: start=0, step=1, limit=4
    $region2: #{remodel_forward.5} parent=1 // loop_pre_header
      _
    $region3: #{remodel_forward.5} parent=1 // loop_header
      %s13 = sphi 0, %s17
      %p14 = scmp.ge.s32.totalorder %s13, 4
      %s20 = sphi 0, %s32
      %s21 = sphi 0, %s28
      %s22 = sphi 0, %s20
      %s23 = sphi 0, %s21
      %s24 = sphi 0, %s22
      %s25 = sphi 0, %s23
      %s35 = sphi 0, %s37
      %s38 = sphi 0, %s35
      %s39 = sphi 0, %s38
      %s55 = sphi 0, %s39
      %s61 = sphi 0, %s63
      %s64 = sphi 0, %s61
      %s65 = sphi 0, %s64
      %s81 = sphi 0, %s65
      %s85 = sphi 0, %s85
      %s87 = sphi 0, %s85
      %s88 = sphi 0, %s87
      %s102 = sphi 0, %s88
      %s108 = sphi 0, %s110
      %s111 = sphi 0, %s108
      %s112 = sphi 0, %s111
      %s128 = sphi 0, %s112
      %s136 = sphi 0, %s138
      %s139 = sphi 0, %s136
      %s140 = sphi 0, %s139
      %s156 = sphi 0, %s140
    $region4: #{remodel_forward.5} parent=1 // loop_header_branch
      %16 = sbr.rel (%p14) target = $region8
    $region5: #{remodel_forward.5} parent=1 // loop_body
      %s18 = ssub.s32 %s13, 1
      %s19 = ssub.s32 %s13, 2
      %s26 = sadd.s32 1, %s21
      %p27 = scmp.ge.s32.totalorder %s26, 1
      %s28 = scalar_select %p27, 0, %s26
      %s29 = sadd.s32 1, %s20
      %s30 = scalar_select %p27, %s29, %s20
      %p31 = scmp.ge.s32.totalorder %s30, 2
      %s32 = scalar_select %p31, 0, %s30
      %s33 = ssub.s32 %s20, %s32
      %p34 = scmp.eq.s32.totalorder %s33, 0
      %s36 = sadd.s32 %s35, 1
      %s37 = scalar_select %p34, %s35, %s36
      %p40 = pneg %p34
      %p41 = scmp.eq.s32.totalorder %s13, 1
      %p42 = por %p40, %p41
      %p43 = scmp.ne.s32.totalorder %s35, %s38
      %p44 = scmp.eq.s32.totalorder %s13, 0
      %p45 = por %p43, %p44
      %p46 = scmp.ne.s32.totalorder %s35, %s38
      %p47 = scmp.eq.s32.totalorder %s18, 1
      %p48 = por %p46, %p47
      %p49 = scmp.ne.s32.totalorder %s38, %s39
      %p50 = scmp.eq.s32.totalorder %s18, 0
      %p51 = por %p49, %p50
      %p52 = scmp.ne.s32.totalorder %s38, %s39
      %p53 = scmp.eq.s32.totalorder %s19, 1
      %p54 = por %p52, %p53
      %p56 = scmp.ne.s32.totalorder %s39, %s55
      %p57 = scmp.eq.s32.totalorder %s19, 0
      %p58 = por %p56, %p57
      %s59 = ssub.s32 %s20, %s32
      %p60 = scmp.eq.s32.totalorder %s59, 0
      %s62 = sadd.s32 %s61, 1
      %s63 = scalar_select %p60, %s61, %s62
      %p66 = pneg %p60
      %p67 = scmp.eq.s32.totalorder %s13, 1
      %p68 = por %p66, %p67
      %p69 = scmp.ne.s32.totalorder %s61, %s64
      %p70 = scmp.eq.s32.totalorder %s13, 0
      %p71 = por %p69, %p70
      %p72 = scmp.ne.s32.totalorder %s61, %s64
      %p73 = scmp.eq.s32.totalorder %s18, 1
      %p74 = por %p72, %p73
      %p75 = scmp.ne.s32.totalorder %s64, %s65
      %p76 = scmp.eq.s32.totalorder %s18, 0
      %p77 = por %p75, %p76
      %p78 = scmp.ne.s32.totalorder %s64, %s65
      %p79 = scmp.eq.s32.totalorder %s19, 1
      %p80 = por %p78, %p79
      %p82 = scmp.ne.s32.totalorder %s65, %s81
      %p83 = scmp.eq.s32.totalorder %s19, 0
      %p84 = por %p82, %p83
      %s86 = sadd.s32 %s85, 1
      %p89 = scmp.eq.s32.totalorder %s13, 1
      %p90 = scmp.ne.s32.totalorder %s85, %s87
      %p91 = scmp.eq.s32.totalorder %s13, 0
      %p92 = por %p90, %p91
      %p93 = scmp.ne.s32.totalorder %s85, %s87
      %p94 = scmp.eq.s32.totalorder %s18, 1
      %p95 = por %p93, %p94
      %p96 = scmp.ne.s32.totalorder %s87, %s88
      %p97 = scmp.eq.s32.totalorder %s18, 0
      %p98 = por %p96, %p97
      %p99 = scmp.ne.s32.totalorder %s87, %s88
      %p100 = scmp.eq.s32.totalorder %s19, 1
      %p101 = por %p99, %p100
      %p103 = scmp.ne.s32.totalorder %s88, %s102
      %p104 = scmp.eq.s32.totalorder %s19, 0
      %p105 = por %p103, %p104
      %s106 = ssub.s32 %s21, %s28
      %p107 = scmp.eq.s32.totalorder %s106, 0
      %s109 = sadd.s32 %s108, 1
      %s110 = scalar_select %p107, %s108, %s109
      %p113 = pneg %p107
      %p114 = scmp.eq.s32.totalorder %s13, 1
      %p115 = por %p113, %p114
      %p116 = scmp.ne.s32.totalorder %s108, %s111
      %p117 = scmp.eq.s32.totalorder %s13, 0
      %p118 = por %p116, %p117
      %p119 = scmp.ne.s32.totalorder %s108, %s111
      %p120 = scmp.eq.s32.totalorder %s18, 1
      %p121 = por %p119, %p120
      %p122 = scmp.ne.s32.totalorder %s111, %s112
      %p123 = scmp.eq.s32.totalorder %s18, 0
      %p124 = por %p122, %p123
      %p125 = scmp.ne.s32.totalorder %s111, %s112
      %p126 = scmp.eq.s32.totalorder %s19, 1
      %p127 = por %p125, %p126
      %p129 = scmp.ne.s32.totalorder %s112, %s128
      %p130 = scmp.eq.s32.totalorder %s19, 0
      %p131 = por %p129, %p130
      %s132 = ssub.s32 %s20, %s32
      %s133 = ssub.s32 %s21, %s28
      %s134 = sor.u32 %s132, %s133
      %p135 = scmp.eq.s32.totalorder %s134, 0
      %s137 = sadd.s32 %s136, 1
      %s138 = scalar_select %p135, %s136, %s137
      %p141 = pneg %p135
      %p142 = scmp.eq.s32.totalorder %s13, 1
      %p143 = por %p141, %p142
      %p144 = scmp.ne.s32.totalorder %s136, %s139
      %p145 = scmp.eq.s32.totalorder %s13, 0
      %p146 = por %p144, %p145
      %p147 = scmp.ne.s32.totalorder %s136, %s139
      %p148 = scmp.eq.s32.totalorder %s18, 1
      %p149 = por %p147, %p148
      %p150 = scmp.ne.s32.totalorder %s139, %s140
      %p151 = scmp.eq.s32.totalorder %s18, 0
      %p152 = por %p150, %p151
      %p153 = scmp.ne.s32.totalorder %s139, %s140
      %p154 = scmp.eq.s32.totalorder %s19, 1
      %p155 = por %p153, %p154
      %p157 = scmp.ne.s32.totalorder %s140, %s156
      %p158 = scmp.eq.s32.totalorder %s19, 0
      %p159 = por %p157, %p158
      %p160 = scmp.le.s32.totalorder 1, %s13
      %p161 = scmp.lt.s32.totalorder %s13, 3
      %p162 = pnand %p160, %p161
      %p163 = pneg %p162
      // Predicated region
      $region9: #{remodel_forward.5} parent=5 // pred_check
        _
      $region10: #{remodel_forward.5} parent=5 // pred_check_branch
        %165 = sbr.rel (%p162) target = $region12
      $region11: #{remodel_forward.5} parent=5 // pred_region
        %s166 = ssub.s32 %s13, 1
        // Predicated region
        $region13: #{remodel_forward.5} parent=11 // pred_check
          %p167 = pneg %p98
        $region14: #{remodel_forward.5} parent=11 // pred_check_branch
          %169 = sbr.rel (%p167) target = $region16
        $region15: #{remodel_forward.5} parent=11 // pred_region
          _
        $region16: #{remodel_forward.5} parent=11 // pred_fallthru
          _
        // Predicated region
        $region17: #{remodel_forward.5} parent=11 // pred_check
          %p170 = pneg %p124
        $region18: #{remodel_forward.5} parent=11 // pred_check_branch
          %172 = sbr.rel (%p170) target = $region20
        $region19: #{remodel_forward.5} parent=11 // pred_region
          %s173 = smul.u32 4, %s23
          %p174 = scmp.lt.s32.totalorder %s173, 3
          %s175 = scalar_select %p174, %s173, 3
          %s176 = scalar_lea.vmem %s3, %s175
          %s177 = smul.u32 4, %s23
        $region20: #{remodel_forward.5} parent=11 // pred_fallthru
          _
      $region12: #{remodel_forward.5} parent=5 // pred_fallthru
        _
      %p178 = scmp.lt.s32.totalorder %s13, 2
      // Predicated region
      $region21: #{remodel_forward.5} parent=5 // pred_check
        %p179 = pneg %p178
      $region22: #{remodel_forward.5} parent=5 // pred_check_branch
        %181 = sbr.rel (%p179) target = $region24
      $region23: #{remodel_forward.5} parent=5 // pred_region
        // Predicated region
        $region25: #{remodel_forward.5} parent=23 // pred_check
          %p182 = pneg %p45
        $region26: #{remodel_forward.5} parent=23 // pred_check_branch
          %184 = sbr.rel (%p182) target = $region28
        $region27: #{remodel_forward.5} parent=23 // pred_region
          %p185 = scmp.lt.s32.totalorder %s20, 1
          %s186 = scalar_select %p185, %s20, 1
          %s187 = scalar_lea.vmem %s0, %s186
        $region28: #{remodel_forward.5} parent=23 // pred_fallthru
          _
        // Predicated region
        $region29: #{remodel_forward.5} parent=23 // pred_check
          %p188 = pneg %p71
        $region30: #{remodel_forward.5} parent=23 // pred_check_branch
          %190 = sbr.rel (%p188) target = $region32
        $region31: #{remodel_forward.5} parent=23 // pred_region
          %p191 = scmp.lt.s32.totalorder %s20, 1
          %s192 = scalar_select %p191, %s20, 1
          %s193 = smul.addr %s192, 4
          %s194 = scalar_lea.vmem %s1, %s193
        $region32: #{remodel_forward.5} parent=23 // pred_fallthru
          _
      $region24: #{remodel_forward.5} parent=5 // pred_fallthru
        _
      %p195 = scmp.le.s32.totalorder 1, %s13
      %p196 = scmp.lt.s32.totalorder %s13, 3
      %p197 = pnand %p195, %p196
      %p198 = pneg %p197
      // Predicated region
      $region33: #{remodel_forward.5} parent=5 // pred_check
        _
      $region34: #{remodel_forward.5} parent=5 // pred_check_branch
        %200 = sbr.rel (%p197) target = $region36
      $region35: #{remodel_forward.5} parent=5 // pred_region
        %s201 = ssub.s32 %s13, 1
        %p202 = scmp.lt.s32.totalorder %s22, 1
        %s203 = scalar_select %p202, %s22, 1
        %s204 = scalar_lea.vmem %s0, %s203
        %p205 = pneg %p51
        %p206 = pneg %p48
        %p207 = scmp.lt.s32.totalorder %s22, 1
        %s208 = scalar_select %p207, %s22, 1
        %s209 = smul.addr %s208, 4
        %s210 = scalar_lea.vmem %s1, %s209
        %p211 = pneg %p77
        %p212 = pneg %p74
        %p213 = pneg %p98
        %p214 = pneg %p95
        %s215 = smul.u32 4, %s23
        %p216 = scmp.lt.s32.totalorder %s215, 3
        %s217 = scalar_select %p216, %s215, 3
        %s218 = scalar_lea.vmem %s3, %s217
        %p219 = pneg %p124
        %p220 = pneg %p121
        %p221 = pneg %p152
        %p222 = pneg %p149
        %s223 = sand.u32 %s139, 1
        %s224 = scalar_lea.sflag [#allocation3], %s223
        %s225 = sand.u32 %s139, 1
        %s226 = smul.addr %s225, 32
        %s227 = scalar_lea.vmem [#allocation2], %s226
        %p228 = scmp.lt.s32.totalorder %s22, 1
        %s229 = scalar_select %p228, %s22, 1
        %s230 = scalar_lea.vmem %s0, %s229
        %p231 = scmp.lt.s32.totalorder %s22, 1
        %s232 = scalar_select %p231, %s22, 1
        %s233 = smul.addr %s232, 4
        %s234 = scalar_lea.vmem %s1, %s233
        %s235 = smul.u32 4, %s23
        %p236 = scmp.lt.s32.totalorder %s235, 3
        %s237 = scalar_select %p236, %s235, 3
        %s238 = scalar_lea.vmem %s3, %s237
        %s239 = smul.u32 4, %s23
        %s240 = smul.u32 4, %s23
        %v242 = vld [vmem:[%s230] sm:$0x1]
        %v243 = vld [vmem:[%s234] sm:$0xf]
        %s244 = smul.u32 %s23, 512
        %s245 = sshra.s32 %s244, 3
        %s246 = sand.u32 %s244, 7
        %s247 = smul.addr %s245, 4
        %s248 = scalar_lea.vmem %s2, %s247
        %v249 = vld [vmem:[%s248] sm:$0xf]
        %v250 = vld [vmem:[%s248 + $0x4] sm:$0xf]
        %v251 = vld [vmem:[%s248 + $0x8] sm:$0xf]
        %v252 = vld [vmem:[%s248 + $0xc] sm:$0xf]
        %v253 = vld [vmem:[%s248 + $0x10] sm:$0xf]
        %v254 = vld [vmem:[%s248 + $0x14] sm:$0xf]
        %v255 = vld [vmem:[%s248 + $0x18] sm:$0xf]
        %v256 = vld [vmem:[%s248 + $0x1c] sm:$0xf]
        %v257 = vld [vmem:[%s248 + $0x20] sm:$0xf]
        %v258 = vld [vmem:[%s248 + $0x24] sm:$0xf]
        %v259 = vld [vmem:[%s248 + $0x28] sm:$0xf]
        %v260 = vld [vmem:[%s248 + $0x2c] sm:$0xf]
        %v261 = vld [vmem:[%s248 + $0x30] sm:$0xf]
        %v262 = vld [vmem:[%s248 + $0x34] sm:$0xf]
        %v263 = vld [vmem:[%s248 + $0x38] sm:$0xf]
        %v264 = vld [vmem:[%s248 + $0x3c] sm:$0xf]
        %v265 = vld [vmem:[%s248 + $0x40] sm:$0xf]
        %v266 = vld [vmem:[%s248 + $0x44] sm:$0xf]
        %v267 = vld [vmem:[%s248 + $0x48] sm:$0xf]
        %v268 = vld [vmem:[%s248 + $0x4c] sm:$0xf]
        %v269 = vld [vmem:[%s248 + $0x50] sm:$0xf]
        %v270 = vld [vmem:[%s248 + $0x54] sm:$0xf]
        %v271 = vld [vmem:[%s248 + $0x58] sm:$0xf]
        %v272 = vld [vmem:[%s248 + $0x5c] sm:$0xf]
        %v273 = vld [vmem:[%s248 + $0x60] sm:$0xf]
        %v274 = vld [vmem:[%s248 + $0x64] sm:$0xf]
        %v275 = vld [vmem:[%s248 + $0x68] sm:$0xf]
        %v276 = vld [vmem:[%s248 + $0x6c] sm:$0xf]
        %v277 = vld [vmem:[%s248 + $0x70] sm:$0xf]
        %v278 = vld [vmem:[%s248 + $0x74] sm:$0xf]
        %v279 = vld [vmem:[%s248 + $0x78] sm:$0xf]
        %v280 = vld [vmem:[%s248 + $0x7c] sm:$0xf]
        %v281 = vld [vmem:[%s248 + $0x80] sm:$0xf]
        %v282 = vld [vmem:[%s248 + $0x84] sm:$0xf]
        %v283 = vld [vmem:[%s248 + $0x88] sm:$0xf]
        %v284 = vld [vmem:[%s248 + $0x8c] sm:$0xf]
        %v285 = vld [vmem:[%s248 + $0x90] sm:$0xf]
        %v286 = vld [vmem:[%s248 + $0x94] sm:$0xf]
        %v287 = vld [vmem:[%s248 + $0x98] sm:$0xf]
        %v288 = vld [vmem:[%s248 + $0x9c] sm:$0xf]
        %v289 = vld [vmem:[%s248 + $0xa0] sm:$0xf]
        %v290 = vld [vmem:[%s248 + $0xa4] sm:$0xf]
        %v291 = vld [vmem:[%s248 + $0xa8] sm:$0xf]
        %v292 = vld [vmem:[%s248 + $0xac] sm:$0xf]
        %v293 = vld [vmem:[%s248 + $0xb0] sm:$0xf]
        %v294 = vld [vmem:[%s248 + $0xb4] sm:$0xf]
        %v295 = vld [vmem:[%s248 + $0xb8] sm:$0xf]
        %v296 = vld [vmem:[%s248 + $0xbc] sm:$0xf]
        %v297 = vld [vmem:[%s248 + $0xc0] sm:$0xf]
        %v298 = vld [vmem:[%s248 + $0xc4] sm:$0xf]
        %v299 = vld [vmem:[%s248 + $0xc8] sm:$0xf]
        %v300 = vld [vmem:[%s248 + $0xcc] sm:$0xf]
        %v301 = vld [vmem:[%s248 + $0xd0] sm:$0xf]
        %v302 = vld [vmem:[%s248 + $0xd4] sm:$0xf]
        %v303 = vld [vmem:[%s248 + $0xd8] sm:$0xf]
        %v304 = vld [vmem:[%s248 + $0xdc] sm:$0xf]
        %v305 = vld [vmem:[%s248 + $0xe0] sm:$0xf]
        %v306 = vld [vmem:[%s248 + $0xe4] sm:$0xf]
        %v307 = vld [vmem:[%s248 + $0xe8] sm:$0xf]
        %v308 = vld [vmem:[%s248 + $0xec] sm:$0xf]
        %v309 = vld [vmem:[%s248 + $0xf0] sm:$0xf]
        %v310 = vld [vmem:[%s248 + $0xf4] sm:$0xf]
        %v311 = vld [vmem:[%s248 + $0xf8] sm:$0xf]
        %v312 = vld [vmem:[%s248 + $0xfc] sm:$0xf]
        %v313 = vld [vmem:[%s238] sm:$0xf]
        %v315 = vlaneseq
        %v316 = vshrl.u32 %v315, 7
        %v317 = vsub.s32 0, %v316
        %v318 = vrot.slane %v313, %v317
        %v319 = vlaneseq
        %v320 = vshrl.u32 %v319, 7
        %v321 = vsub.s32 1, %v320
        %v322 = vrot.slane %v313, %v321
        %v323 = vlaneseq
        %v324 = vshrl.u32 %v323, 7
        %v325 = vsub.s32 2, %v324
        %v326 = vrot.slane %v313, %v325
        %v327 = vlaneseq
        %v328 = vshrl.u32 %v327, 7
        %v329 = vsub.s32 3, %v328
        %v330 = vrot.slane %v313, %v329
        %v399 = vunpack.c.l.b16 %v249
        %v400 = vunpack.c.l.b16 %v250
        %v401 = vunpack.c.l.b16 %v251
        %v402 = vunpack.c.l.b16 %v252
        %v403 = vunpack.c.l.b16 %v253
        %v404 = vunpack.c.l.b16 %v254
        %v405 = vunpack.c.l.b16 %v255
        %v406 = vunpack.c.l.b16 %v256
        %v407 = vunpack.c.l.b16 %v257
        %v408 = vunpack.c.l.b16 %v258
        %v409 = vunpack.c.l.b16 %v259
        %v410 = vunpack.c.l.b16 %v260
        %v411 = vunpack.c.l.b16 %v261
        %v412 = vunpack.c.l.b16 %v262
        %v413 = vunpack.c.l.b16 %v263
        %v414 = vunpack.c.l.b16 %v264
        %v415 = vunpack.c.l.b16 %v265
        %v416 = vunpack.c.l.b16 %v266
        %v417 = vunpack.c.l.b16 %v267
        %v418 = vunpack.c.l.b16 %v268
        %v419 = vunpack.c.l.b16 %v269
        %v420 = vunpack.c.l.b16 %v270
        %v421 = vunpack.c.l.b16 %v271
        %v422 = vunpack.c.l.b16 %v272
        %v423 = vunpack.c.l.b16 %v273
        %v424 = vunpack.c.l.b16 %v274
        %v425 = vunpack.c.l.b16 %v275
        %v426 = vunpack.c.l.b16 %v276
        %v427 = vunpack.c.l.b16 %v277
        %v428 = vunpack.c.l.b16 %v278
        %v429 = vunpack.c.l.b16 %v279
        %v430 = vunpack.c.l.b16 %v280
        %v431 = vunpack.c.l.b16 %v281
        %v432 = vunpack.c.l.b16 %v282
        %v433 = vunpack.c.l.b16 %v283
        %v434 = vunpack.c.l.b16 %v284
        %v435 = vunpack.c.l.b16 %v285
        %v436 = vunpack.c.l.b16 %v286
        %v437 = vunpack.c.l.b16 %v287
        %v438 = vunpack.c.l.b16 %v288
        %v439 = vunpack.c.l.b16 %v289
        %v440 = vunpack.c.l.b16 %v290
        %v441 = vunpack.c.l.b16 %v291
        %v442 = vunpack.c.l.b16 %v292
        %v443 = vunpack.c.l.b16 %v293
        %v444 = vunpack.c.l.b16 %v294
        %v445 = vunpack.c.l.b16 %v295
        %v446 = vunpack.c.l.b16 %v296
        %v447 = vunpack.c.l.b16 %v297
        %v448 = vunpack.c.l.b16 %v298
        %v449 = vunpack.c.l.b16 %v299
        %v450 = vunpack.c.l.b16 %v300
        %v451 = vunpack.c.l.b16 %v301
        %v452 = vunpack.c.l.b16 %v302
        %v453 = vunpack.c.l.b16 %v303
        %v454 = vunpack.c.l.b16 %v304
        %v455 = vunpack.c.l.b16 %v305
        %v456 = vunpack.c.l.b16 %v306
        %v457 = vunpack.c.l.b16 %v307
        %v458 = vunpack.c.l.b16 %v308
        %v459 = vunpack.c.l.b16 %v309
        %v460 = vunpack.c.l.b16 %v310
        %v461 = vunpack.c.l.b16 %v311
        %v462 = vunpack.c.l.b16 %v312
        %v463 = vpack.c.b16 %v400, %v399
        %v464 = vpack.c.b16 %v402, %v401
        %v465 = vpack.c.b16 %v404, %v403
        %v466 = vpack.c.b16 %v406, %v405
        %v467 = vpack.c.b16 %v408, %v407
        %v468 = vpack.c.b16 %v410, %v409
        %v469 = vpack.c.b16 %v412, %v411
        %v470 = vpack.c.b16 %v414, %v413
        %v471 = vpack.c.b16 %v416, %v415
        %v472 = vpack.c.b16 %v418, %v417
        %v473 = vpack.c.b16 %v420, %v419
        %v474 = vpack.c.b16 %v422, %v421
        %v475 = vpack.c.b16 %v424, %v423
        %v476 = vpack.c.b16 %v426, %v425
        %v477 = vpack.c.b16 %v428, %v427
        %v478 = vpack.c.b16 %v430, %v429
        %v479 = vpack.c.b16 %v432, %v431
        %v480 = vpack.c.b16 %v434, %v433
        %v481 = vpack.c.b16 %v436, %v435
        %v482 = vpack.c.b16 %v438, %v437
        %v483 = vpack.c.b16 %v440, %v439
        %v484 = vpack.c.b16 %v442, %v441
        %v485 = vpack.c.b16 %v444, %v443
        %v486 = vpack.c.b16 %v446, %v445
        %v487 = vpack.c.b16 %v448, %v447
        %v488 = vpack.c.b16 %v450, %v449
        %v489 = vpack.c.b16 %v452, %v451
        %v490 = vpack.c.b16 %v454, %v453
        %v491 = vpack.c.b16 %v456, %v455
        %v492 = vpack.c.b16 %v458, %v457
        %v493 = vpack.c.b16 %v460, %v459
        %v494 = vpack.c.b16 %v462, %v461
        %vm495 = vcmask 523264
        %v497 = vsel %vm495, %v243, 0
        %v500 = vsel %vm495, %v463, 0
        %v503 = vsel %vm495, %v464, 0
        %v506 = vsel %vm495, %v465, 0
        %v509 = vsel %vm495, %v466, 0
        %v512 = vsel %vm495, %v467, 0
        %v515 = vsel %vm495, %v468, 0
        %v518 = vsel %vm495, %v469, 0
        %v521 = vsel %vm495, %v470, 0
        %v524 = vsel %vm495, %v471, 0
        %v527 = vsel %vm495, %v472, 0
        %v530 = vsel %vm495, %v473, 0
        %v533 = vsel %vm495, %v474, 0
        %v536 = vsel %vm495, %v475, 0
        %v539 = vsel %vm495, %v476, 0
        %v542 = vsel %vm495, %v477, 0
        %v545 = vsel %vm495, %v478, 0
        %v548 = vsel %vm495, %v479, 0
        %v551 = vsel %vm495, %v480, 0
        %v554 = vsel %vm495, %v481, 0
        %v557 = vsel %vm495, %v482, 0
        %v560 = vsel %vm495, %v483, 0
        %v563 = vsel %vm495, %v484, 0
        %v566 = vsel %vm495, %v485, 0
        %v569 = vsel %vm495, %v486, 0
        %v572 = vsel %vm495, %v487, 0
        %v575 = vsel %vm495, %v488, 0
        %v578 = vsel %vm495, %v489, 0
        %v581 = vsel %vm495, %v490, 0
        %v584 = vsel %vm495, %v491, 0
        %v587 = vsel %vm495, %v492, 0
        %v590 = vsel %vm495, %v493, 0
        %v593 = vsel %vm495, %v494, 0
        %595 = vmatprep.subr.bf16.mxu0 0
        %596 = vmatpush1.bf16.xpose.msra.mxu0 %v521
        %597 = vmatprep.subr.bf16.mxu0 0
        %598 = vmatpush1.bf16.xpose.msra.mxu0 %v518
        %599 = vmatprep.subr.bf16.mxu0 0
        %600 = vmatpush1.bf16.xpose.msra.mxu0 %v515
        %601 = vmatprep.subr.bf16.mxu0 0
        %602 = vmatpush1.bf16.xpose.msra.mxu0 %v512
        %603 = vmatprep.subr.bf16.mxu0 0
        %604 = vmatpush1.bf16.xpose.msra.mxu0 %v509
        %605 = vmatprep.subr.bf16.mxu0 0
        %606 = vmatpush1.bf16.xpose.msra.mxu0 %v506
        %607 = vmatprep.subr.bf16.mxu0 0
        %608 = vmatpush1.bf16.xpose.msra.mxu0 %v503
        %609 = vmatprep.subr.bf16.mxu0 0
        %610 = vmatpush1.bf16.xpose.msra.mxu0 %v500
        %611 = vmatprep.subr.bf16.mxu0 0
        %612 = vmatpush2.bf16.xpose.msra.mxu0 %v545
        %613 = vmatprep.subr.bf16.mxu0 0
        %614 = vmatpush2.bf16.xpose.msra.mxu0 %v542
        %615 = vmatprep.subr.bf16.mxu0 0
        %616 = vmatpush2.bf16.xpose.msra.mxu0 %v539
        %617 = vmatprep.subr.bf16.mxu0 0
        %618 = vmatpush2.bf16.xpose.msra.mxu0 %v536
        %619 = vmatprep.subr.bf16.mxu0 0
        %620 = vmatpush2.bf16.xpose.msra.mxu0 %v533
        %621 = vmatprep.subr.bf16.mxu0 0
        %622 = vmatpush2.bf16.xpose.msra.mxu0 %v530
        %623 = vmatprep.subr.bf16.mxu0 0
        %624 = vmatpush2.bf16.xpose.msra.mxu0 %v527
        %625 = vmatprep.subr.bf16.mxu0 0
        %626 = vmatpush2.bf16.xpose.msra.mxu0 %v524
        %627 = vmatprep.mubr.bf16.mxu0 0
        %628 = vmatmul.mubr.bf16.gmra.mxu0 %v497
        %v629 = vpop.f32.mrf.mxu0
        %v630 = vadd.f32 %v318, %v629
        %v631 = vpop.f32.mrf.mxu0
        %v632 = vadd.f32 %v322, %v631
        %v633 = vpop.f32.mrf.mxu0
        %v634 = vpop.f32.mrf.mxu0
        %635 = vdwg.mxu0
        %636 = vmatprep.subr.bf16.mxu0 0
        %637 = vmatpush1.bf16.xpose.msra.mxu0 %v569
        %638 = vmatprep.subr.bf16.mxu0 0
        %639 = vmatpush1.bf16.xpose.msra.mxu0 %v566
        %640 = vmatprep.subr.bf16.mxu0 0
        %641 = vmatpush1.bf16.xpose.msra.mxu0 %v563
        %642 = vmatprep.subr.bf16.mxu0 0
        %643 = vmatpush1.bf16.xpose.msra.mxu0 %v560
        %644 = vmatprep.subr.bf16.mxu0 0
        %645 = vmatpush1.bf16.xpose.msra.mxu0 %v557
        %646 = vmatprep.subr.bf16.mxu0 0
        %647 = vmatpush1.bf16.xpose.msra.mxu0 %v554
        %648 = vmatprep.subr.bf16.mxu0 0
        %649 = vmatpush1.bf16.xpose.msra.mxu0 %v551
        %650 = vmatprep.subr.bf16.mxu0 0
        %651 = vmatpush1.bf16.xpose.msra.mxu0 %v548
        %652 = vmatprep.subr.bf16.mxu0 0
        %653 = vmatpush2.bf16.xpose.msra.mxu0 %v593
        %654 = vmatprep.subr.bf16.mxu0 0
        %655 = vmatpush2.bf16.xpose.msra.mxu0 %v590
        %656 = vmatprep.subr.bf16.mxu0 0
        %657 = vmatpush2.bf16.xpose.msra.mxu0 %v587
        %658 = vmatprep.subr.bf16.mxu0 0
        %659 = vmatpush2.bf16.xpose.msra.mxu0 %v584
        %660 = vmatprep.subr.bf16.mxu0 0
        %661 = vmatpush2.bf16.xpose.msra.mxu0 %v581
        %662 = vmatprep.subr.bf16.mxu0 0
        %663 = vmatpush2.bf16.xpose.msra.mxu0 %v578
        %664 = vmatprep.subr.bf16.mxu0 0
        %665 = vmatpush2.bf16.xpose.msra.mxu0 %v575
        %666 = vmatprep.subr.bf16.mxu0 0
        %667 = vmatpush2.bf16.xpose.msra.mxu0 %v572
        %668 = vmatprep.mubr.bf16.mxu0 0
        %669 = vmatmul.mubr.bf16.gmra.mxu0 %v497
        %v670 = vpop.f32.mrf.mxu0
        %v671 = vadd.f32 %v326, %v670
        %v672 = vpop.f32.mrf.mxu0
        %v673 = vadd.f32 %v330, %v672
        %v674 = vpop.f32.mrf.mxu0
        %v675 = vpop.f32.mrf.mxu0
        %676 = vdwg.mxu0
        %v677 = vsub.f32 %v242, 1.0
        %v678 = vmul.f32 %v677, 1.25e+11
        %v679 = vmul.f32 %v242, 0.125
        %v680 = vpack.c.bf16 %v630, %v630
        %682 = vrot.lane.b32.xlu0 %v680, 64
        %v683 = vpop.permute.xlu0 %682
        %v685 = vsel %vm495, %v680, 0
        %v688 = vsel %vm495, %v683, 0
        %690 = vmatprep.subr.bf16.mxu0 0
        %691 = vmatpush1.bf16.xpose.msra.mxu0 0
        %692 = vmatprep.subr.bf16.mxu0 0
        %693 = vmatpush1.bf16.xpose.msra.mxu0 0
        %694 = vmatprep.subr.bf16.mxu0 0
        %695 = vmatpush1.bf16.xpose.msra.mxu0 0
        %696 = vmatprep.subr.bf16.mxu0 0
        %697 = vmatpush1.bf16.xpose.msra.mxu0 0
        %698 = vmatprep.subr.bf16.mxu0 0
        %699 = vmatpush1.bf16.xpose.msra.mxu0 0
        %700 = vmatprep.subr.bf16.mxu0 0
        %701 = vmatpush1.bf16.xpose.msra.mxu0 0
        %702 = vmatprep.subr.bf16.mxu0 0
        %703 = vmatpush1.bf16.xpose.msra.mxu0 0
        %704 = vmatprep.subr.bf16.mxu0 0
        %705 = vmatpush1.bf16.xpose.msra.mxu0 %v688
        %706 = vmatprep.subr.bf16.mxu0 0
        %707 = vmatpush2.bf16.xpose.msra.mxu0 0
        %708 = vmatprep.subr.bf16.mxu0 0
        %709 = vmatpush2.bf16.xpose.msra.mxu0 0
        %710 = vmatprep.subr.bf16.mxu0 0
        %711 = vmatpush2.bf16.xpose.msra.mxu0 0
        %712 = vmatprep.subr.bf16.mxu0 0
        %713 = vmatpush2.bf16.xpose.msra.mxu0 0
        %714 = vmatprep.subr.bf16.mxu0 0
        %715 = vmatpush2.bf16.xpose.msra.mxu0 0
        %716 = vmatprep.subr.bf16.mxu0 0
        %717 = vmatpush2.bf16.xpose.msra.mxu0 0
        %718 = vmatprep.subr.bf16.mxu0 0
        %719 = vmatpush2.bf16.xpose.msra.mxu0 0
        %720 = vmatprep.subr.bf16.mxu0 0
        %721 = vmatpush2.bf16.xpose.msra.mxu0 0
        %722 = vmatprep.mubr.bf16.mxu0 0
        %723 = vmatmul.mubr.bf16.gmra.mxu0 %v685
        %v724 = vpop.f32.mrf.mxu0
        %v725 = vadd.f32 0.0, %v724
        %v726 = vpop.f32.mrf.mxu0
        %v727 = vpop.f32.mrf.mxu0
        %v728 = vpop.f32.mrf.mxu0
        %729 = vdwg.mxu0
        %v731 = vlaneseq
        %v732 = vshrl.u32 %v731, 7
        %v733 = vsub.s32 0, %v732
        %v734 = vrot.slane %v679, %v733
        %v736 = vmul.f32 %v725, %v734
        %v738 = vlaneseq
        %v739 = vshrl.u32 %v738, 7
        %v740 = vsub.s32 0, %v739
        %v741 = vrot.slane %v678, %v740
        %v743 = vadd.f32 %v736, %v741
        %vm744 = vcmask 64512
        %745 = vst.msk [vmem:[%s227] sm:$0xff] %vm744, %v743
        %v746 = vpack.c.bf16 %v632, %v632
        %748 = vrot.lane.b32.xlu0 %v746, 64
        %v749 = vpop.permute.xlu0 %748
        %v751 = vsel %vm495, %v746, 0
        %v754 = vsel %vm495, %v749, 0
        %756 = vmatprep.subr.bf16.mxu0 0
        %757 = vmatpush1.bf16.xpose.msra.mxu0 0
        %758 = vmatprep.subr.bf16.mxu0 0
        %759 = vmatpush1.bf16.xpose.msra.mxu0 0
        %760 = vmatprep.subr.bf16.mxu0 0
        %761 = vmatpush1.bf16.xpose.msra.mxu0 0
        %762 = vmatprep.subr.bf16.mxu0 0
        %763 = vmatpush1.bf16.xpose.msra.mxu0 0
        %764 = vmatprep.subr.bf16.mxu0 0
        %765 = vmatpush1.bf16.xpose.msra.mxu0 0
        %766 = vmatprep.subr.bf16.mxu0 0
        %767 = vmatpush1.bf16.xpose.msra.mxu0 0
        %768 = vmatprep.subr.bf16.mxu0 0
        %769 = vmatpush1.bf16.xpose.msra.mxu0 0
        %770 = vmatprep.subr.bf16.mxu0 0
        %771 = vmatpush1.bf16.xpose.msra.mxu0 %v754
        %772 = vmatprep.subr.bf16.mxu0 0
        %773 = vmatpush2.bf16.xpose.msra.mxu0 0
        %774 = vmatprep.subr.bf16.mxu0 0
        %775 = vmatpush2.bf16.xpose.msra.mxu0 0
        %776 = vmatprep.subr.bf16.mxu0 0
        %777 = vmatpush2.bf16.xpose.msra.mxu0 0
        %778 = vmatprep.subr.bf16.mxu0 0
        %779 = vmatpush2.bf16.xpose.msra.mxu0 0
        %780 = vmatprep.subr.bf16.mxu0 0
        %781 = vmatpush2.bf16.xpose.msra.mxu0 0
        %782 = vmatprep.subr.bf16.mxu0 0
        %783 = vmatpush2.bf16.xpose.msra.mxu0 0
        %784 = vmatprep.subr.bf16.mxu0 0
        %785 = vmatpush2.bf16.xpose.msra.mxu0 0
        %786 = vmatprep.subr.bf16.mxu0 0
        %787 = vmatpush2.bf16.xpose.msra.mxu0 0
        %788 = vmatprep.mubr.bf16.mxu0 0
        %789 = vmatmul.mubr.bf16.gmra.mxu0 %v751
        %v790 = vpop.f32.mrf.mxu0
        %v791 = vadd.f32 0.0, %v790
        %v792 = vpop.f32.mrf.mxu0
        %v793 = vpop.f32.mrf.mxu0
        %v794 = vpop.f32.mrf.mxu0
        %795 = vdwg.mxu0
        %v796 = vmul.f32 %v791, %v734
        %v797 = vadd.f32 %v796, %v741
        %s798 = scalar_lea.vmem %s227, 8 [#allocation2]
        %799 = vst.msk [vmem:[%s798] sm:$0xff] %vm744, %v797
        %v800 = vpack.c.bf16 %v671, %v671
        %802 = vrot.lane.b32.xlu0 %v800, 64
        %v803 = vpop.permute.xlu0 %802
        %v805 = vsel %vm495, %v800, 0
        %v808 = vsel %vm495, %v803, 0
        %810 = vmatprep.subr.bf16.mxu0 0
        %811 = vmatpush1.bf16.xpose.msra.mxu0 0
        %812 = vmatprep.subr.bf16.mxu0 0
        %813 = vmatpush1.bf16.xpose.msra.mxu0 0
        %814 = vmatprep.subr.bf16.mxu0 0
        %815 = vmatpush1.bf16.xpose.msra.mxu0 0
        %816 = vmatprep.subr.bf16.mxu0 0
        %817 = vmatpush1.bf16.xpose.msra.mxu0 0
        %818 = vmatprep.subr.bf16.mxu0 0
        %819 = vmatpush1.bf16.xpose.msra.mxu0 0
        %820 = vmatprep.subr.bf16.mxu0 0
        %821 = vmatpush1.bf16.xpose.msra.mxu0 0
        %822 = vmatprep.subr.bf16.mxu0 0
        %823 = vmatpush1.bf16.xpose.msra.mxu0 0
        %824 = vmatprep.subr.bf16.mxu0 0
        %825 = vmatpush1.bf16.xpose.msra.mxu0 %v808
        %826 = vmatprep.subr.bf16.mxu0 0
        %827 = vmatpush2.bf16.xpose.msra.mxu0 0
        %828 = vmatprep.subr.bf16.mxu0 0
        %829 = vmatpush2.bf16.xpose.msra.mxu0 0
        %830 = vmatprep.subr.bf16.mxu0 0
        %831 = vmatpush2.bf16.xpose.msra.mxu0 0
        %832 = vmatprep.subr.bf16.mxu0 0
        %833 = vmatpush2.bf16.xpose.msra.mxu0 0
        %834 = vmatprep.subr.bf16.mxu0 0
        %835 = vmatpush2.bf16.xpose.msra.mxu0 0
        %836 = vmatprep.subr.bf16.mxu0 0
        %837 = vmatpush2.bf16.xpose.msra.mxu0 0
        %838 = vmatprep.subr.bf16.mxu0 0
        %839 = vmatpush2.bf16.xpose.msra.mxu0 0
        %840 = vmatprep.subr.bf16.mxu0 0
        %841 = vmatpush2.bf16.xpose.msra.mxu0 0
        %842 = vmatprep.mubr.bf16.mxu0 0
        %843 = vmatmul.mubr.bf16.gmra.mxu0 %v805
        %v844 = vpop.f32.mrf.mxu0
        %v845 = vadd.f32 0.0, %v844
        %v846 = vpop.f32.mrf.mxu0
        %v847 = vpop.f32.mrf.mxu0
        %v848 = vpop.f32.mrf.mxu0
        %849 = vdwg.mxu0
        %v850 = vmul.f32 %v845, %v734
        %v851 = vadd.f32 %v850, %v741
        %s852 = scalar_lea.vmem %s227, 16 [#allocation2]
        %853 = vst.msk [vmem:[%s852] sm:$0xff] %vm744, %v851
        %v854 = vpack.c.bf16 %v673, %v673
        %856 = vrot.lane.b32.xlu0 %v854, 64
        %v857 = vpop.permute.xlu0 %856
        %v859 = vsel %vm495, %v854, 0
        %v862 = vsel %vm495, %v857, 0
        %864 = vmatprep.subr.bf16.mxu0 0
        %865 = vmatpush1.bf16.xpose.msra.mxu0 0
        %866 = vmatprep.subr.bf16.mxu0 0
        %867 = vmatpush1.bf16.xpose.msra.mxu0 0
        %868 = vmatprep.subr.bf16.mxu0 0
        %869 = vmatpush1.bf16.xpose.msra.mxu0 0
        %870 = vmatprep.subr.bf16.mxu0 0
        %871 = vmatpush1.bf16.xpose.msra.mxu0 0
        %872 = vmatprep.subr.bf16.mxu0 0
        %873 = vmatpush1.bf16.xpose.msra.mxu0 0
        %874 = vmatprep.subr.bf16.mxu0 0
        %875 = vmatpush1.bf16.xpose.msra.mxu0 0
        %876 = vmatprep.subr.bf16.mxu0 0
        %877 = vmatpush1.bf16.xpose.msra.mxu0 0
        %878 = vmatprep.subr.bf16.mxu0 0
        %879 = vmatpush1.bf16.xpose.msra.mxu0 %v862
        %880 = vmatprep.subr.bf16.mxu0 0
        %881 = vmatpush2.bf16.xpose.msra.mxu0 0
        %882 = vmatprep.subr.bf16.mxu0 0
        %883 = vmatpush2.bf16.xpose.msra.mxu0 0
        %884 = vmatprep.subr.bf16.mxu0 0
        %885 = vmatpush2.bf16.xpose.msra.mxu0 0
        %886 = vmatprep.subr.bf16.mxu0 0
        %887 = vmatpush2.bf16.xpose.msra.mxu0 0
        %888 = vmatprep.subr.bf16.mxu0 0
        %889 = vmatpush2.bf16.xpose.msra.mxu0 0
        %890 = vmatprep.subr.bf16.mxu0 0
        %891 = vmatpush2.bf16.xpose.msra.mxu0 0
        %892 = vmatprep.subr.bf16.mxu0 0
        %893 = vmatpush2.bf16.xpose.msra.mxu0 0
        %894 = vmatprep.subr.bf16.mxu0 0
        %895 = vmatpush2.bf16.xpose.msra.mxu0 0
        %896 = vmatprep.mubr.bf16.mxu0 0
        %897 = vmatmul.mubr.bf16.gmra.mxu0 %v859
        %v898 = vpop.f32.mrf.mxu0
        %v899 = vadd.f32 0.0, %v898
        %v900 = vpop.f32.mrf.mxu0
        %v901 = vpop.f32.mrf.mxu0
        %v902 = vpop.f32.mrf.mxu0
        %903 = vdwg.mxu0
        %v904 = vmul.f32 %v899, %v734
        %v905 = vadd.f32 %v904, %v741
        %s906 = scalar_lea.vmem %s227, 24 [#allocation2]
        %907 = vst.msk [vmem:[%s906] sm:$0xff] %vm744, %v905
        %s908 = sand.u32 %s139, 1
        %s909 = scalar_lea.sflag [#allocation3], %s908
        %s910 = sand.u32 %s139, 1
        %s911 = smul.addr %s910, 32
        %s912 = scalar_lea.vmem [#allocation2], %s911
        // Predicated region
        $region37: #{remodel_forward.5} parent=35 // pred_check
          %p913 = pneg %p149
        $region38: #{remodel_forward.5} parent=35 // pred_check_branch
          %915 = sbr.rel (%p913) target = $region40
        $region39: #{remodel_forward.5} parent=35 // pred_region
          %s916 = smul.u32 4, %s23
          %s918 = ssub.s32 512, 512
          %919 = vsyncadd %s909, %s918
          %s920 = smul.addr %s22, 4
          %s921 = sadd.s32 %s916, %s920
          %s922 = smul.addr %s921, 128
          %s923 = scalar_lea.hbm %s4, %s922
          %s924 = sshll.u32 %s912, 4
          %s925 = int_to_ptr.vmem [resolvable:$true] %s924
          %930 = dma.vmem_to_hbm [thread:$0]  %s925, 512, %s923, %s909, 128, 128, 8
        $region40: #{remodel_forward.5} parent=35 // pred_fallthru
          _
      $region36: #{remodel_forward.5} parent=5 // pred_fallthru
        _
      %p931 = scmp.le.s32.totalorder 2, %s13
      // Predicated region
      $region41: #{remodel_forward.5} parent=5 // pred_check
        %p932 = pneg %p931
      $region42: #{remodel_forward.5} parent=5 // pred_check_branch
        %934 = sbr.rel (%p932) target = $region44
      $region43: #{remodel_forward.5} parent=5 // pred_region
        %s935 = ssub.s32 %s13, 2
        // Predicated region
        $region45: #{remodel_forward.5} parent=43 // pred_check
          %p936 = pneg %p155
        $region46: #{remodel_forward.5} parent=43 // pred_check_branch
          %938 = sbr.rel (%p936) target = $region48
        $region47: #{remodel_forward.5} parent=43 // pred_region
          %s939 = sand.u32 %s140, 1
          %s940 = scalar_lea.sflag [#allocation3], %s939
          %s941 = sand.u32 %s140, 1
          %s942 = smul.addr %s941, 32
          %s943 = scalar_lea.vmem [#allocation2], %s942
          %944 = dma.done %s940, 512
        $region48: #{remodel_forward.5} parent=43 // pred_fallthru
          _
      $region44: #{remodel_forward.5} parent=5 // pred_fallthru
        _
    $region6: #{remodel_forward.5} parent=1 // loop_footer
      %s17 = sadd.s32 1, %s13
    $region7: #{remodel_forward.5} parent=1 // loop_footer_branch
      %12 = sbr.rel target = $region3
    $region8: #{remodel_forward.5} parent=1 // loop_exit
      _
    %945 = vsyncpa [#allocation3], 1
    %s946 = scalar_lea.sflag [#allocation3], 1
    %947 = vsyncpa %s946, 1

// kernel: remodel_forward.3
$region0: #{remodel_forward.3}
  #allocation0 [shape = 'u32[]', space=smem, size = 0x4, offset = 0x4, fixed_abs, tag = 'smem constant byte address 0x4 - core index']
  #allocation1 [shape = 'u32[144,128]{1,0:T(1,128)}', space=vmem, size = 0x12000, scoped, tag = 'internal scratch']
  %s0 = inlined_call_operand.vmem [shape: f32[2,1,8], index: 0, kind: input, shape index: {}]
  %s1 = inlined_call_operand.vmem [shape: f32[2,8,64], index: 1, kind: input, shape index: {}]
  %s2 = inlined_call_operand.vmem [shape: f32[2,1,64], index: 2, kind: input, shape index: {}]
  %s3 = inlined_call_operand.vmem [shape: f32[8,8], index: 3, kind: input, shape index: {}]
  %s4 = inlined_call_operand.vmem [shape: bf16[64,256], index: 4, kind: input, shape index: {}]
  %s5 = inlined_call_operand.vmem [shape: f32[1,256], index: 5, kind: input, shape index: {}]
  %s6 = inlined_call_operand.vmem [shape: bf16[64,256], index: 6, kind: input, shape index: {}]
  %s7 = inlined_call_operand.vmem [shape: f32[1,256], index: 7, kind: input, shape index: {}]
  %s8 = inlined_call_operand.vmem [shape: f32[8,64], index: 8, kind: input, shape index: {}]
  %s9 = inlined_call_operand.vmem [shape: f32[8,64], index: 9, kind: input, shape index: {}]
  %s10 = inlined_call_operand.vmem [shape: bf16[64,64], index: 10, kind: input, shape index: {}]
  %s11 = inlined_call_operand.vmem [shape: f32[1,64], index: 11, kind: input, shape index: {}]
  %s12 = inlined_call_operand.vmem [shape: f32[1,64], index: 12, kind: input, shape index: {}]
  %s13 = inlined_call_operand.vmem [shape: f32[1,64], index: 13, kind: input, shape index: {}]
  %s14 = inlined_call_operand.hbm [shape: f32[2,2,8,8], index: 14, kind: output, shape index: {0}]
  %s15 = inlined_call_operand.vmem [shape: bf16[2,8,64], index: 15, kind: output, shape index: {1}]
  %s16 = inlined_call_operand.vmem [shape: bf16[2,8,64], index: 16, kind: output, shape index: {2}]
  %17 = xla_tuple %s14, %s15, %s16
  %s18 = sld [smem:[#allocation0]]
  $region105: #{remodel_forward.3} parent=0
    _
  %s20 = ssub.s32 1, %s18
  %s21 = scalar_select 0, %s20, %s18
  $region1: #{remodel_forward.3} parent=0
    #allocation2 [shape = 'u8[16384]{0}', space=vmem, size = 0x4000, scoped, tag = 'output window, operand 0']
    #allocation3 [shape = 's32[2]{0}', space=sflag, size = 0x8, scoped, tag = 'scoped memory for remodel_forward.3']
    %22 = vsyncpa [#allocation3], 0
    %s23 = scalar_lea.sflag [#allocation3], 1
    %24 = vsyncpa %s23, 0
    loop: start=0, step=1, limit=4
    $region2: #{remodel_forward.3} parent=1 // loop_pre_header
      _
    $region3: #{remodel_forward.3} parent=1 // loop_header
      %s26 = sphi 0, %s30
      %p27 = scmp.ge.s32.totalorder %s26, 4
      %s36 = sphi 0, %s38
      %s39 = sphi 0, %s36
      %s40 = sphi 0, %s39
      %s56 = sphi 0, %s40
      %s62 = sphi 0, %s64
      %s65 = sphi 0, %s62
      %s66 = sphi 0, %s65
      %s82 = sphi 0, %s66
      %s88 = sphi 0, %s90
      %s91 = sphi 0, %s88
      %s92 = sphi 0, %s91
      %s108 = sphi 0, %s92
      %s112 = sphi 0, %s112
      %s114 = sphi 0, %s112
      %s115 = sphi 0, %s114
      %s129 = sphi 0, %s115
      %s133 = sphi 0, %s133
      %s135 = sphi 0, %s133
      %s136 = sphi 0, %s135
      %s150 = sphi 0, %s136
      %s154 = sphi 0, %s154
      %s156 = sphi 0, %s154
      %s157 = sphi 0, %s156
      %s171 = sphi 0, %s157
      %s175 = sphi 0, %s175
      %s177 = sphi 0, %s175
      %s178 = sphi 0, %s177
      %s192 = sphi 0, %s178
      %s196 = sphi 0, %s196
      %s198 = sphi 0, %s196
      %s199 = sphi 0, %s198
      %s213 = sphi 0, %s199
      %s217 = sphi 0, %s217
      %s219 = sphi 0, %s217
      %s220 = sphi 0, %s219
      %s234 = sphi 0, %s220
      %s238 = sphi 0, %s238
      %s240 = sphi 0, %s238
      %s241 = sphi 0, %s240
      %s255 = sphi 0, %s241
      %s259 = sphi 0, %s259
      %s261 = sphi 0, %s259
      %s262 = sphi 0, %s261
      %s276 = sphi 0, %s262
      %s280 = sphi 0, %s280
      %s282 = sphi 0, %s280
      %s283 = sphi 0, %s282
      %s297 = sphi 0, %s283
      %s301 = sphi 0, %s301
      %s303 = sphi 0, %s301
      %s304 = sphi 0, %s303
      %s318 = sphi 0, %s304
      %s322 = sphi 0, %s322
      %s324 = sphi 0, %s322
      %s325 = sphi 0, %s324
      %s339 = sphi 0, %s325
      %s345 = sphi 0, %s347
      %s348 = sphi 0, %s345
      %s349 = sphi 0, %s348
      %s365 = sphi 0, %s349
      %s371 = sphi 0, %s373
      %s374 = sphi 0, %s371
      %s375 = sphi 0, %s374
      %s391 = sphi 0, %s375
      %s397 = sphi 0, %s399
      %s400 = sphi 0, %s397
      %s401 = sphi 0, %s400
      %s417 = sphi 0, %s401
    $region4: #{remodel_forward.3} parent=1 // loop_header_branch
      %29 = sbr.rel (%p27) target = $region8
    $region5: #{remodel_forward.3} parent=1 // loop_body
      %s31 = ssub.s32 %s26, 1
      %s32 = ssub.s32 %s26, 2
      %s33 = sadd.s32 %s26, 1
      %s34 = ssub.s32 %s26, %s33
      %p35 = scmp.eq.s32.totalorder %s34, 0
      %s37 = sadd.s32 %s36, 1
      %s38 = scalar_select %p35, %s36, %s37
      %p41 = pneg %p35
      %p42 = scmp.eq.s32.totalorder %s26, 1
      %p43 = por %p41, %p42
      %p44 = scmp.ne.s32.totalorder %s36, %s39
      %p45 = scmp.eq.s32.totalorder %s26, 0
      %p46 = por %p44, %p45
      %p47 = scmp.ne.s32.totalorder %s36, %s39
      %p48 = scmp.eq.s32.totalorder %s31, 1
      %p49 = por %p47, %p48
      %p50 = scmp.ne.s32.totalorder %s39, %s40
      %p51 = scmp.eq.s32.totalorder %s31, 0
      %p52 = por %p50, %p51
      %p53 = scmp.ne.s32.totalorder %s39, %s40
      %p54 = scmp.eq.s32.totalorder %s32, 1
      %p55 = por %p53, %p54
      %p57 = scmp.ne.s32.totalorder %s40, %s56
      %p58 = scmp.eq.s32.totalorder %s32, 0
      %p59 = por %p57, %p58
      %s60 = ssub.s32 %s26, %s33
      %p61 = scmp.eq.s32.totalorder %s60, 0
      %s63 = sadd.s32 %s62, 1
      %s64 = scalar_select %p61, %s62, %s63
      %p67 = pneg %p61
      %p68 = scmp.eq.s32.totalorder %s26, 1
      %p69 = por %p67, %p68
      %p70 = scmp.ne.s32.totalorder %s62, %s65
      %p71 = scmp.eq.s32.totalorder %s26, 0
      %p72 = por %p70, %p71
      %p73 = scmp.ne.s32.totalorder %s62, %s65
      %p74 = scmp.eq.s32.totalorder %s31, 1
      %p75 = por %p73, %p74
      %p76 = scmp.ne.s32.totalorder %s65, %s66
      %p77 = scmp.eq.s32.totalorder %s31, 0
      %p78 = por %p76, %p77
      %p79 = scmp.ne.s32.totalorder %s65, %s66
      %p80 = scmp.eq.s32.totalorder %s32, 1
      %p81 = por %p79, %p80
      %p83 = scmp.ne.s32.totalorder %s66, %s82
      %p84 = scmp.eq.s32.totalorder %s32, 0
      %p85 = por %p83, %p84
      %s86 = ssub.s32 %s26, %s33
      %p87 = scmp.eq.s32.totalorder %s86, 0
      %s89 = sadd.s32 %s88, 1
      %s90 = scalar_select %p87, %s88, %s89
      %p93 = pneg %p87
      %p94 = scmp.eq.s32.totalorder %s26, 1
      %p95 = por %p93, %p94
      %p96 = scmp.ne.s32.totalorder %s88, %s91
      %p97 = scmp.eq.s32.totalorder %s26, 0
      %p98 = por %p96, %p97
      %p99 = scmp.ne.s32.totalorder %s88, %s91
      %p100 = scmp.eq.s32.totalorder %s31, 1
      %p101 = por %p99, %p100
      %p102 = scmp.ne.s32.totalorder %s91, %s92
      %p103 = scmp.eq.s32.totalorder %s31, 0
      %p104 = por %p102, %p103
      %p105 = scmp.ne.s32.totalorder %s91, %s92
      %p106 = scmp.eq.s32.totalorder %s32, 1
      %p107 = por %p105, %p106
      %p109 = scmp.ne.s32.totalorder %s92, %s108
      %p110 = scmp.eq.s32.totalorder %s32, 0
      %p111 = por %p109, %p110
      %s113 = sadd.s32 %s112, 1
      %p116 = scmp.eq.s32.totalorder %s26, 1
      %p117 = scmp.ne.s32.totalorder %s112, %s114
      %p118 = scmp.eq.s32.totalorder %s26, 0
      %p119 = por %p117, %p118
      %p120 = scmp.ne.s32.totalorder %s112, %s114
      %p121 = scmp.eq.s32.totalorder %s31, 1
      %p122 = por %p120, %p121
      %p123 = scmp.ne.s32.totalorder %s114, %s115
      %p124 = scmp.eq.s32.totalorder %s31, 0
      %p125 = por %p123, %p124
      %p126 = scmp.ne.s32.totalorder %s114, %s115
      %p127 = scmp.eq.s32.totalorder %s32, 1
      %p128 = por %p126, %p127
      %p130 = scmp.ne.s32.totalorder %s115, %s129
      %p131 = scmp.eq.s32.totalorder %s32, 0
      %p132 = por %p130, %p131
      %s134 = sadd.s32 %s133, 1
      %p137 = scmp.eq.s32.totalorder %s26, 1
      %p138 = scmp.ne.s32.totalorder %s133, %s135
      %p139 = scmp.eq.s32.totalorder %s26, 0
      %p140 = por %p138, %p139
      %p141 = scmp.ne.s32.totalorder %s133, %s135
      %p142 = scmp.eq.s32.totalorder %s31, 1
      %p143 = por %p141, %p142
      %p144 = scmp.ne.s32.totalorder %s135, %s136
      %p145 = scmp.eq.s32.totalorder %s31, 0
      %p146 = por %p144, %p145
      %p147 = scmp.ne.s32.totalorder %s135, %s136
      %p148 = scmp.eq.s32.totalorder %s32, 1
      %p149 = por %p147, %p148
      %p151 = scmp.ne.s32.totalorder %s136, %s150
      %p152 = scmp.eq.s32.totalorder %s32, 0
      %p153 = por %p151, %p152
      %s155 = sadd.s32 %s154, 1
      %p158 = scmp.eq.s32.totalorder %s26, 1
      %p159 = scmp.ne.s32.totalorder %s154, %s156
      %p160 = scmp.eq.s32.totalorder %s26, 0
      %p161 = por %p159, %p160
      %p162 = scmp.ne.s32.totalorder %s154, %s156
      %p163 = scmp.eq.s32.totalorder %s31, 1
      %p164 = por %p162, %p163
      %p165 = scmp.ne.s32.totalorder %s156, %s157
      %p166 = scmp.eq.s32.totalorder %s31, 0
      %p167 = por %p165, %p166
      %p168 = scmp.ne.s32.totalorder %s156, %s157
      %p169 = scmp.eq.s32.totalorder %s32, 1
      %p170 = por %p168, %p169
      %p172 = scmp.ne.s32.totalorder %s157, %s171
      %p173 = scmp.eq.s32.totalorder %s32, 0
      %p174 = por %p172, %p173
      %s176 = sadd.s32 %s175, 1
      %p179 = scmp.eq.s32.totalorder %s26, 1
      %p180 = scmp.ne.s32.totalorder %s175, %s177
      %p181 = scmp.eq.s32.totalorder %s26, 0
      %p182 = por %p180, %p181
      %p183 = scmp.ne.s32.totalorder %s175, %s177
      %p184 = scmp.eq.s32.totalorder %s31, 1
      %p185 = por %p183, %p184
      %p186 = scmp.ne.s32.totalorder %s177, %s178
      %p187 = scmp.eq.s32.totalorder %s31, 0
      %p188 = por %p186, %p187
      %p189 = scmp.ne.s32.totalorder %s177, %s178
      %p190 = scmp.eq.s32.totalorder %s32, 1
      %p191 = por %p189, %p190
      %p193 = scmp.ne.s32.totalorder %s178, %s192
      %p194 = scmp.eq.s32.totalorder %s32, 0
      %p195 = por %p193, %p194
      %s197 = sadd.s32 %s196, 1
      %p200 = scmp.eq.s32.totalorder %s26, 1
      %p201 = scmp.ne.s32.totalorder %s196, %s198
      %p202 = scmp.eq.s32.totalorder %s26, 0
      %p203 = por %p201, %p202
      %p204 = scmp.ne.s32.totalorder %s196, %s198
      %p205 = scmp.eq.s32.totalorder %s31, 1
      %p206 = por %p204, %p205
      %p207 = scmp.ne.s32.totalorder %s198, %s199
      %p208 = scmp.eq.s32.totalorder %s31, 0
      %p209 = por %p207, %p208
      %p210 = scmp.ne.s32.totalorder %s198, %s199
      %p211 = scmp.eq.s32.totalorder %s32, 1
      %p212 = por %p210, %p211
      %p214 = scmp.ne.s32.totalorder %s199, %s213
      %p215 = scmp.eq.s32.totalorder %s32, 0
      %p216 = por %p214, %p215
      %s218 = sadd.s32 %s217, 1
      %p221 = scmp.eq.s32.totalorder %s26, 1
      %p222 = scmp.ne.s32.totalorder %s217, %s219
      %p223 = scmp.eq.s32.totalorder %s26, 0
      %p224 = por %p222, %p223
      %p225 = scmp.ne.s32.totalorder %s217, %s219
      %p226 = scmp.eq.s32.totalorder %s31, 1
      %p227 = por %p225, %p226
      %p228 = scmp.ne.s32.totalorder %s219, %s220
      %p229 = scmp.eq.s32.totalorder %s31, 0
      %p230 = por %p228, %p229
      %p231 = scmp.ne.s32.totalorder %s219, %s220
      %p232 = scmp.eq.s32.totalorder %s32, 1
      %p233 = por %p231, %p232
      %p235 = scmp.ne.s32.totalorder %s220, %s234
      %p236 = scmp.eq.s32.totalorder %s32, 0
      %p237 = por %p235, %p236
      %s239 = sadd.s32 %s238, 1
      %p242 = scmp.eq.s32.totalorder %s26, 1
      %p243 = scmp.ne.s32.totalorder %s238, %s240
      %p244 = scmp.eq.s32.totalorder %s26, 0
      %p245 = por %p243, %p244
      %p246 = scmp.ne.s32.totalorder %s238, %s240
      %p247 = scmp.eq.s32.totalorder %s31, 1
      %p248 = por %p246, %p247
      %p249 = scmp.ne.s32.totalorder %s240, %s241
      %p250 = scmp.eq.s32.totalorder %s31, 0
      %p251 = por %p249, %p250
      %p252 = scmp.ne.s32.totalorder %s240, %s241
      %p253 = scmp.eq.s32.totalorder %s32, 1
      %p254 = por %p252, %p253
      %p256 = scmp.ne.s32.totalorder %s241, %s255
      %p257 = scmp.eq.s32.totalorder %s32, 0
      %p258 = por %p256, %p257
      %s260 = sadd.s32 %s259, 1
      %p263 = scmp.eq.s32.totalorder %s26, 1
      %p264 = scmp.ne.s32.totalorder %s259, %s261
      %p265 = scmp.eq.s32.totalorder %s26, 0
      %p266 = por %p264, %p265
      %p267 = scmp.ne.s32.totalorder %s259, %s261
      %p268 = scmp.eq.s32.totalorder %s31, 1
      %p269 = por %p267, %p268
      %p270 = scmp.ne.s32.totalorder %s261, %s262
      %p271 = scmp.eq.s32.totalorder %s31, 0
      %p272 = por %p270, %p271
      %p273 = scmp.ne.s32.totalorder %s261, %s262
      %p274 = scmp.eq.s32.totalorder %s32, 1
      %p275 = por %p273, %p274
      %p277 = scmp.ne.s32.totalorder %s262, %s276
      %p278 = scmp.eq.s32.totalorder %s32, 0
      %p279 = por %p277, %p278
      %s281 = sadd.s32 %s280, 1
      %p284 = scmp.eq.s32.totalorder %s26, 1
      %p285 = scmp.ne.s32.totalorder %s280, %s282
      %p286 = scmp.eq.s32.totalorder %s26, 0
      %p287 = por %p285, %p286
      %p288 = scmp.ne.s32.totalorder %s280, %s282
      %p289 = scmp.eq.s32.totalorder %s31, 1
      %p290 = por %p288, %p289
      %p291 = scmp.ne.s32.totalorder %s282, %s283
      %p292 = scmp.eq.s32.totalorder %s31, 0
      %p293 = por %p291, %p292
      %p294 = scmp.ne.s32.totalorder %s282, %s283
      %p295 = scmp.eq.s32.totalorder %s32, 1
      %p296 = por %p294, %p295
      %p298 = scmp.ne.s32.totalorder %s283, %s297
      %p299 = scmp.eq.s32.totalorder %s32, 0
      %p300 = por %p298, %p299
      %s302 = sadd.s32 %s301, 1
      %p305 = scmp.eq.s32.totalorder %s26, 1
      %p306 = scmp.ne.s32.totalorder %s301, %s303
      %p307 = scmp.eq.s32.totalorder %s26, 0
      %p308 = por %p306, %p307
      %p309 = scmp.ne.s32.totalorder %s301, %s303
      %p310 = scmp.eq.s32.totalorder %s31, 1
      %p311 = por %p309, %p310
      %p312 = scmp.ne.s32.totalorder %s303, %s304
      %p313 = scmp.eq.s32.totalorder %s31, 0
      %p314 = por %p312, %p313
      %p315 = scmp.ne.s32.totalorder %s303, %s304
      %p316 = scmp.eq.s32.totalorder %s32, 1
      %p317 = por %p315, %p316
      %p319 = scmp.ne.s32.totalorder %s304, %s318
      %p320 = scmp.eq.s32.totalorder %s32, 0
      %p321 = por %p319, %p320
      %s323 = sadd.s32 %s322, 1
      %p326 = scmp.eq.s32.totalorder %s26, 1
      %p327 = scmp.ne.s32.totalorder %s322, %s324
      %p328 = scmp.eq.s32.totalorder %s26, 0
      %p329 = por %p327, %p328
      %p330 = scmp.ne.s32.totalorder %s322, %s324
      %p331 = scmp.eq.s32.totalorder %s31, 1
      %p332 = por %p330, %p331
      %p333 = scmp.ne.s32.totalorder %s324, %s325
      %p334 = scmp.eq.s32.totalorder %s31, 0
      %p335 = por %p333, %p334
      %p336 = scmp.ne.s32.totalorder %s324, %s325
      %p337 = scmp.eq.s32.totalorder %s32, 1
      %p338 = por %p336, %p337
      %p340 = scmp.ne.s32.totalorder %s325, %s339
      %p341 = scmp.eq.s32.totalorder %s32, 0
      %p342 = por %p340, %p341
      %s343 = ssub.s32 %s26, %s33
      %p344 = scmp.eq.s32.totalorder %s343, 0
      %s346 = sadd.s32 %s345, 1
      %s347 = scalar_select %p344, %s345, %s346
      %p350 = pneg %p344
      %p351 = scmp.eq.s32.totalorder %s26, 1
      %p352 = por %p350, %p351
      %p353 = scmp.ne.s32.totalorder %s345, %s348
      %p354 = scmp.eq.s32.totalorder %s26, 0
      %p355 = por %p353, %p354
      %p356 = scmp.ne.s32.totalorder %s345, %s348
      %p357 = scmp.eq.s32.totalorder %s31, 1
      %p358 = por %p356, %p357
      %p359 = scmp.ne.s32.totalorder %s348, %s349
      %p360 = scmp.eq.s32.totalorder %s31, 0
      %p361 = por %p359, %p360
      %p362 = scmp.ne.s32.totalorder %s348, %s349
      %p363 = scmp.eq.s32.totalorder %s32, 1
      %p364 = por %p362, %p363
      %p366 = scmp.ne.s32.totalorder %s349, %s365
      %p367 = scmp.eq.s32.totalorder %s32, 0
      %p368 = por %p366, %p367
      %s369 = ssub.s32 %s26, %s33
      %p370 = scmp.eq.s32.totalorder %s369, 0
      %s372 = sadd.s32 %s371, 1
      %s373 = scalar_select %p370, %s371, %s372
      %p376 = pneg %p370
      %p377 = scmp.eq.s32.totalorder %s26, 1
      %p378 = por %p376, %p377
      %p379 = scmp.ne.s32.totalorder %s371, %s374
      %p380 = scmp.eq.s32.totalorder %s26, 0
      %p381 = por %p379, %p380
      %p382 = scmp.ne.s32.totalorder %s371, %s374
      %p383 = scmp.eq.s32.totalorder %s31, 1
      %p384 = por %p382, %p383
      %p385 = scmp.ne.s32.totalorder %s374, %s375
      %p386 = scmp.eq.s32.totalorder %s31, 0
      %p387 = por %p385, %p386
      %p388 = scmp.ne.s32.totalorder %s374, %s375
      %p389 = scmp.eq.s32.totalorder %s32, 1
      %p390 = por %p388, %p389
      %p392 = scmp.ne.s32.totalorder %s375, %s391
      %p393 = scmp.eq.s32.totalorder %s32, 0
      %p394 = por %p392, %p393
      %s395 = ssub.s32 %s26, %s33
      %p396 = scmp.eq.s32.totalorder %s395, 0
      %s398 = sadd.s32 %s397, 1
      %s399 = scalar_select %p396, %s397, %s398
      %p402 = pneg %p396
      %p403 = scmp.eq.s32.totalorder %s26, 1
      %p404 = por %p402, %p403
      %p405 = scmp.ne.s32.totalorder %s397, %s400
      %p406 = scmp.eq.s32.totalorder %s26, 0
      %p407 = por %p405, %p406
      %p408 = scmp.ne.s32.totalorder %s397, %s400
      %p409 = scmp.eq.s32.totalorder %s31, 1
      %p410 = por %p408, %p409
      %p411 = scmp.ne.s32.totalorder %s400, %s401
      %p412 = scmp.eq.s32.totalorder %s31, 0
      %p413 = por %p411, %p412
      %p414 = scmp.ne.s32.totalorder %s400, %s401
      %p415 = scmp.eq.s32.totalorder %s32, 1
      %p416 = por %p414, %p415
      %p418 = scmp.ne.s32.totalorder %s401, %s417
      %p419 = scmp.eq.s32.totalorder %s32, 0
      %p420 = por %p418, %p419
      %p421 = scmp.le.s32.totalorder 1, %s26
      %p422 = scmp.lt.s32.totalorder %s26, 3
      %p423 = pnand %p421, %p422
      %p424 = pneg %p423
      // Predicated region
      $region9: #{remodel_forward.3} parent=5 // pred_check
        _
      $region10: #{remodel_forward.3} parent=5 // pred_check_branch
        %426 = sbr.rel (%p423) target = $region12
      $region11: #{remodel_forward.3} parent=5 // pred_region
        %s427 = ssub.s32 %s26, 1
        // Predicated region
        $region13: #{remodel_forward.3} parent=11 // pred_check
          %p428 = pneg %p125
        $region14: #{remodel_forward.3} parent=11 // pred_check_branch
          %430 = sbr.rel (%p428) target = $region16
        $region15: #{remodel_forward.3} parent=11 // pred_region
          _
        $region16: #{remodel_forward.3} parent=11 // pred_fallthru
          _
        // Predicated region
        $region17: #{remodel_forward.3} parent=11 // pred_check
          %p431 = pneg %p146
        $region18: #{remodel_forward.3} parent=11 // pred_check_branch
          %433 = sbr.rel (%p431) target = $region20
        $region19: #{remodel_forward.3} parent=11 // pred_region
          _
        $region20: #{remodel_forward.3} parent=11 // pred_fallthru
          _
        // Predicated region
        $region21: #{remodel_forward.3} parent=11 // pred_check
          %p434 = pneg %p167
        $region22: #{remodel_forward.3} parent=11 // pred_check_branch
          %436 = sbr.rel (%p434) target = $region24
        $region23: #{remodel_forward.3} parent=11 // pred_region
          _
        $region24: #{remodel_forward.3} parent=11 // pred_fallthru
          _
        // Predicated region
        $region25: #{remodel_forward.3} parent=11 // pred_check
          %p437 = pneg %p188
        $region26: #{remodel_forward.3} parent=11 // pred_check_branch
          %439 = sbr.rel (%p437) target = $region28
        $region27: #{remodel_forward.3} parent=11 // pred_region
          _
        $region28: #{remodel_forward.3} parent=11 // pred_fallthru
          _
        // Predicated region
        $region29: #{remodel_forward.3} parent=11 // pred_check
          %p440 = pneg %p209
        $region30: #{remodel_forward.3} parent=11 // pred_check_branch
          %442 = sbr.rel (%p440) target = $region32
        $region31: #{remodel_forward.3} parent=11 // pred_region
          _
        $region32: #{remodel_forward.3} parent=11 // pred_fallthru
          _
        // Predicated region
        $region33: #{remodel_forward.3} parent=11 // pred_check
          %p443 = pneg %p230
        $region34: #{remodel_forward.3} parent=11 // pred_check_branch
          %445 = sbr.rel (%p443) target = $region36
        $region35: #{remodel_forward.3} parent=11 // pred_region
          _
        $region36: #{remodel_forward.3} parent=11 // pred_fallthru
          _
        // Predicated region
        $region37: #{remodel_forward.3} parent=11 // pred_check
          %p446 = pneg %p251
        $region38: #{remodel_forward.3} parent=11 // pred_check_branch
          %448 = sbr.rel (%p446) target = $region40
        $region39: #{remodel_forward.3} parent=11 // pred_region
          _
        $region40: #{remodel_forward.3} parent=11 // pred_fallthru
          _
        // Predicated region
        $region41: #{remodel_forward.3} parent=11 // pred_check
          %p449 = pneg %p272
        $region42: #{remodel_forward.3} parent=11 // pred_check_branch
          %451 = sbr.rel (%p449) target = $region44
        $region43: #{remodel_forward.3} parent=11 // pred_region
          _
        $region44: #{remodel_forward.3} parent=11 // pred_fallthru
          _
        // Predicated region
        $region45: #{remodel_forward.3} parent=11 // pred_check
          %p452 = pneg %p293
        $region46: #{remodel_forward.3} parent=11 // pred_check_branch
          %454 = sbr.rel (%p452) target = $region48
        $region47: #{remodel_forward.3} parent=11 // pred_region
          _
        $region48: #{remodel_forward.3} parent=11 // pred_fallthru
          _
        // Predicated region
        $region49: #{remodel_forward.3} parent=11 // pred_check
          %p455 = pneg %p314
        $region50: #{remodel_forward.3} parent=11 // pred_check_branch
          %457 = sbr.rel (%p455) target = $region52
        $region51: #{remodel_forward.3} parent=11 // pred_region
          _
        $region52: #{remodel_forward.3} parent=11 // pred_fallthru
          _
        // Predicated region
        $region53: #{remodel_forward.3} parent=11 // pred_check
          %p458 = pneg %p335
        $region54: #{remodel_forward.3} parent=11 // pred_check_branch
          %460 = sbr.rel (%p458) target = $region56
        $region55: #{remodel_forward.3} parent=11 // pred_region
          _
        $region56: #{remodel_forward.3} parent=11 // pred_fallthru
          _
      $region12: #{remodel_forward.3} parent=5 // pred_fallthru
        _
      %p461 = scmp.lt.s32.totalorder %s26, 2
      // Predicated region
      $region57: #{remodel_forward.3} parent=5 // pred_check
        %p462 = pneg %p461
      $region58: #{remodel_forward.3} parent=5 // pred_check_branch
        %464 = sbr.rel (%p462) target = $region60
      $region59: #{remodel_forward.3} parent=5 // pred_region
        // Predicated region
        $region61: #{remodel_forward.3} parent=59 // pred_check
          %p465 = pneg %p46
        $region62: #{remodel_forward.3} parent=59 // pred_check_branch
          %467 = sbr.rel (%p465) target = $region64
        $region63: #{remodel_forward.3} parent=59 // pred_region
          %p468 = scmp.lt.s32.totalorder %s26, 1
          %s469 = scalar_select %p468, %s26, 1
          %s470 = scalar_lea.vmem %s0, %s469
        $region64: #{remodel_forward.3} parent=59 // pred_fallthru
          _
        // Predicated region
        $region65: #{remodel_forward.3} parent=59 // pred_check
          %p471 = pneg %p72
        $region66: #{remodel_forward.3} parent=59 // pred_check_branch
          %473 = sbr.rel (%p471) target = $region68
        $region67: #{remodel_forward.3} parent=59 // pred_region
          %p474 = scmp.lt.s32.totalorder %s26, 1
          %s475 = scalar_select %p474, %s26, 1
          %s476 = smul.addr %s475, 8
          %s477 = scalar_lea.vmem %s1, %s476
        $region68: #{remodel_forward.3} parent=59 // pred_fallthru
          _
        // Predicated region
        $region69: #{remodel_forward.3} parent=59 // pred_check
          %p478 = pneg %p98
        $region70: #{remodel_forward.3} parent=59 // pred_check_branch
          %480 = sbr.rel (%p478) target = $region72
        $region71: #{remodel_forward.3} parent=59 // pred_region
          %p481 = scmp.lt.s32.totalorder %s26, 1
          %s482 = scalar_select %p481, %s26, 1
          %s483 = scalar_lea.vmem %s2, %s482
        $region72: #{remodel_forward.3} parent=59 // pred_fallthru
          _
      $region60: #{remodel_forward.3} parent=5 // pred_fallthru
        _
      %p484 = scmp.le.s32.totalorder 1, %s26
      %p485 = scmp.lt.s32.totalorder %s26, 3
      %p486 = pnand %p484, %p485
      %p487 = pneg %p486
      // Predicated region
      $region73: #{remodel_forward.3} parent=5 // pred_check
        _
      $region74: #{remodel_forward.3} parent=5 // pred_check_branch
        %489 = sbr.rel (%p486) target = $region76
      $region75: #{remodel_forward.3} parent=5 // pred_region
        %s490 = ssub.s32 %s26, 1
        %p491 = scmp.lt.s32.totalorder %s31, 1
        %s492 = scalar_select %p491, %s31, 1
        %s493 = scalar_lea.vmem %s0, %s492
        %p494 = pneg %p52
        %p495 = pneg %p49
        %p496 = scmp.lt.s32.totalorder %s31, 1
        %s497 = scalar_select %p496, %s31, 1
        %s498 = smul.addr %s497, 8
        %s499 = scalar_lea.vmem %s1, %s498
        %p500 = pneg %p78
        %p501 = pneg %p75
        %p502 = scmp.lt.s32.totalorder %s31, 1
        %s503 = scalar_select %p502, %s31, 1
        %s504 = scalar_lea.vmem %s2, %s503
        %p505 = pneg %p104
        %p506 = pneg %p101
        %p507 = pneg %p125
        %p508 = pneg %p122
        %p509 = pneg %p146
        %p510 = pneg %p143
        %p511 = pneg %p167
        %p512 = pneg %p164
        %p513 = pneg %p188
        %p514 = pneg %p185
        %p515 = pneg %p209
        %p516 = pneg %p206
        %p517 = pneg %p230
        %p518 = pneg %p227
        %p519 = pneg %p251
        %p520 = pneg %p248
        %p521 = pneg %p272
        %p522 = pneg %p269
        %p523 = pneg %p293
        %p524 = pneg %p290
        %p525 = pneg %p314
        %p526 = pneg %p311
        %p527 = pneg %p335
        %p528 = pneg %p332
        %p529 = pneg %p361
        %p530 = pneg %p358
        %s531 = sand.u32 %s348, 1
        %s532 = scalar_lea.sflag [#allocation3], %s531
        %s533 = sand.u32 %s348, 1
        %s534 = smul.addr %s533, 16
        %s535 = scalar_lea.vmem [#allocation2], %s534
        %p536 = pneg %p387
        %p537 = pneg %p384
        %p538 = scmp.lt.s32.totalorder %s31, 1
        %s539 = scalar_select %p538, %s31, 1
        %s540 = smul.addr %s539, 4
        %s541 = scalar_lea.vmem %s15, %s540
        %p542 = pneg %p413
        %p543 = pneg %p410
        %p544 = scmp.lt.s32.totalorder %s31, 1
        %s545 = scalar_select %p544, %s31, 1
        %s546 = smul.addr %s545, 4
        %s547 = scalar_lea.vmem %s16, %s546
        %p548 = scmp.lt.s32.totalorder %s31, 1
        %s549 = scalar_select %p548, %s31, 1
        %s550 = scalar_lea.vmem %s0, %s549
        %p551 = scmp.lt.s32.totalorder %s31, 1
        %s552 = scalar_select %p551, %s31, 1
        %s553 = smul.addr %s552, 8
        %s554 = scalar_lea.vmem %s1, %s553
        %p555 = scmp.lt.s32.totalorder %s31, 1
        %s556 = scalar_select %p555, %s31, 1
        %s557 = scalar_lea.vmem %s2, %s556
        %p558 = scmp.lt.s32.totalorder %s31, 1
        %s559 = scalar_select %p558, %s31, 1
        %s560 = smul.addr %s559, 4
        %s561 = scalar_lea.vmem %s15, %s560
        %p562 = scmp.lt.s32.totalorder %s31, 1
        %s563 = scalar_select %p562, %s31, 1
        %s564 = smul.addr %s563, 4
        %s565 = scalar_lea.vmem %s16, %s564
        %v567 = vld [vmem:[%s550] sm:$0x1]
        %v568 = vld [vmem:[%s554] sm:$0xff]
        %v569 = vld [vmem:[%s557] sm:$0x1]
        %v571 = vlaneseq
        %v572 = vshrl.u32 %v571, 7
        %v573 = vsub.s32 0, %v572
        %v574 = vrot.slane %v569, %v573
        %v576 = vadd.f32 %v568, %v574
        %v577 = vpack.c.bf16 %v576, %v576
        %v578 = vld [vmem:[%s4] sm:$0xff]
        %v579 = vld [vmem:[%s4 + $0x8] sm:$0xff]
        %v580 = vld [vmem:[%s4 + $0x10] sm:$0xff]
        %v581 = vld [vmem:[%s4 + $0x18] sm:$0xff]
        %v582 = vld [vmem:[%s4 + $0x20] sm:$0xff]
        %v583 = vld [vmem:[%s4 + $0x28] sm:$0xff]
        %v584 = vld [vmem:[%s4 + $0x30] sm:$0xff]
        %v585 = vld [vmem:[%s4 + $0x38] sm:$0xff]
        %v586 = vld [vmem:[%s5] sm:$0x3]
        %v588 = vlaneseq
        %v589 = vshrl.u32 %v588, 7
        %v590 = vsub.s32 0, %v589
        %v591 = vrot.slane %v586, %v590
        %v592 = vlaneseq
        %v593 = vshrl.u32 %v592, 7
        %v594 = vsub.s32 1, %v593
        %v595 = vrot.slane %v586, %v594
        %v606 = vunpack.c.l.b16 %v578
        %v607 = vunpack.c.h.b16 %v578
        %v608 = vunpack.c.l.b16 %v579
        %v609 = vunpack.c.h.b16 %v579
        %v610 = vunpack.c.l.b16 %v580
        %v611 = vunpack.c.h.b16 %v580
        %v612 = vunpack.c.l.b16 %v581
        %v613 = vunpack.c.h.b16 %v581
        %v614 = vunpack.c.l.b16 %v582
        %v615 = vunpack.c.h.b16 %v582
        %v616 = vunpack.c.l.b16 %v583
        %v617 = vunpack.c.h.b16 %v583
        %v618 = vunpack.c.l.b16 %v584
        %v619 = vunpack.c.h.b16 %v584
        %v620 = vunpack.c.l.b16 %v585
        %v621 = vunpack.c.h.b16 %v585
        %v622 = vpack.c.b16 %v608, %v606
        %v623 = vpack.c.b16 %v609, %v607
        %v624 = vpack.c.b16 %v612, %v610
        %v625 = vpack.c.b16 %v613, %v611
        %v626 = vpack.c.b16 %v616, %v614
        %v627 = vpack.c.b16 %v617, %v615
        %v628 = vpack.c.b16 %v620, %v618
        %v629 = vpack.c.b16 %v621, %v619
        %vm638 = vcmask 523264
        %v640 = vsel %vm638, %v577, 0
        %642 = vmatprep.subr.bf16.mxu0 0
        %643 = vmatpush1.bf16.msra.mxu0 0
        %644 = vmatprep.subr.bf16.mxu0 0
        %645 = vmatpush1.bf16.msra.mxu0 0
        %646 = vmatprep.subr.bf16.mxu0 0
        %647 = vmatpush1.bf16.msra.mxu0 0
        %648 = vmatprep.subr.bf16.mxu0 0
        %649 = vmatpush1.bf16.msra.mxu0 0
        %650 = vmatprep.subr.bf16.mxu0 %v629
        %651 = vmatpush1.bf16.msra.mxu0 %v628
        %652 = vmatprep.subr.bf16.mxu0 %v627
        %653 = vmatpush1.bf16.msra.mxu0 %v626
        %654 = vmatprep.subr.bf16.mxu0 %v625
        %655 = vmatpush1.bf16.msra.mxu0 %v624
        %656 = vmatprep.subr.bf16.mxu0 %v623
        %657 = vmatpush1.bf16.msra.mxu0 %v622
        %658 = vmatprep.subr.bf16.mxu0 0
        %659 = vmatpush2.bf16.msra.mxu0 0
        %660 = vmatprep.subr.bf16.mxu0 0
        %661 = vmatpush2.bf16.msra.mxu0 0
        %662 = vmatprep.subr.bf16.mxu0 0
        %663 = vmatpush2.bf16.msra.mxu0 0
        %664 = vmatprep.subr.bf16.mxu0 0
        %665 = vmatpush2.bf16.msra.mxu0 0
        %666 = vmatprep.subr.bf16.mxu0 0
        %667 = vmatpush2.bf16.msra.mxu0 0
        %668 = vmatprep.subr.bf16.mxu0 0
        %669 = vmatpush2.bf16.msra.mxu0 0
        %670 = vmatprep.subr.bf16.mxu0 0
        %671 = vmatpush2.bf16.msra.mxu0 0
        %672 = vmatprep.subr.bf16.mxu0 0
        %673 = vmatpush2.bf16.msra.mxu0 0
        %674 = vmatprep.mubr.bf16.mxu0 0
        %675 = vmatmul.mubr.bf16.gmra.mxu0 %v640
        %v676 = vpop.f32.mrf.mxu0
        %v677 = vadd.f32 %v591, %v676
        %v678 = vpop.f32.mrf.mxu0
        %v679 = vadd.f32 %v595, %v678
        %v680 = vpop.f32.mrf.mxu0
        %v681 = vpop.f32.mrf.mxu0
        %682 = vdwg.mxu0
        %v683 = vld [vmem:[%s6] sm:$0xff]
        %v684 = vld [vmem:[%s6 + $0x8] sm:$0xff]
        %v685 = vld [vmem:[%s6 + $0x10] sm:$0xff]
        %v686 = vld [vmem:[%s6 + $0x18] sm:$0xff]
        %v687 = vld [vmem:[%s6 + $0x20] sm:$0xff]
        %v688 = vld [vmem:[%s6 + $0x28] sm:$0xff]
        %v689 = vld [vmem:[%s6 + $0x30] sm:$0xff]
        %v690 = vld [vmem:[%s6 + $0x38] sm:$0xff]
        %v691 = vld [vmem:[%s7] sm:$0x3]
        %v693 = vlaneseq
        %v694 = vshrl.u32 %v693, 7
        %v695 = vsub.s32 0, %v694
        %v696 = vrot.slane %v691, %v695
        %v697 = vlaneseq
        %v698 = vshrl.u32 %v697, 7
        %v699 = vsub.s32 1, %v698
        %v700 = vrot.slane %v691, %v699
        %v711 = vunpack.c.l.b16 %v683
        %v712 = vunpack.c.h.b16 %v683
        %v713 = vunpack.c.l.b16 %v684
        %v714 = vunpack.c.h.b16 %v684
        %v715 = vunpack.c.l.b16 %v685
        %v716 = vunpack.c.h.b16 %v685
        %v717 = vunpack.c.l.b16 %v686
        %v718 = vunpack.c.h.b16 %v686
        %v719 = vunpack.c.l.b16 %v687
        %v720 = vunpack.c.h.b16 %v687
        %v721 = vunpack.c.l.b16 %v688
        %v722 = vunpack.c.h.b16 %v688
        %v723 = vunpack.c.l.b16 %v689
        %v724 = vunpack.c.h.b16 %v689
        %v725 = vunpack.c.l.b16 %v690
        %v726 = vunpack.c.h.b16 %v690
        %v727 = vpack.c.b16 %v713, %v711
        %v728 = vpack.c.b16 %v714, %v712
        %v729 = vpack.c.b16 %v717, %v715
        %v730 = vpack.c.b16 %v718, %v716
        %v731 = vpack.c.b16 %v721, %v719
        %v732 = vpack.c.b16 %v722, %v720
        %v733 = vpack.c.b16 %v725, %v723
        %v734 = vpack.c.b16 %v726, %v724
        %743 = vmatprep.subr.bf16.mxu0 0
        %744 = vmatpush1.bf16.msra.mxu0 0
        %745 = vmatprep.subr.bf16.mxu0 0
        %746 = vmatpush1.bf16.msra.mxu0 0
        %747 = vmatprep.subr.bf16.mxu0 0
        %748 = vmatpush1.bf16.msra.mxu0 0
        %749 = vmatprep.subr.bf16.mxu0 0
        %750 = vmatpush1.bf16.msra.mxu0 0
        %751 = vmatprep.subr.bf16.mxu0 %v734
        %752 = vmatpush1.bf16.msra.mxu0 %v733
        %753 = vmatprep.subr.bf16.mxu0 %v732
        %754 = vmatpush1.bf16.msra.mxu0 %v731
        %755 = vmatprep.subr.bf16.mxu0 %v730
        %756 = vmatpush1.bf16.msra.mxu0 %v729
        %757 = vmatprep.subr.bf16.mxu0 %v728
        %758 = vmatpush1.bf16.msra.mxu0 %v727
        %759 = vmatprep.subr.bf16.mxu0 0
        %760 = vmatpush2.bf16.msra.mxu0 0
        %761 = vmatprep.subr.bf16.mxu0 0
        %762 = vmatpush2.bf16.msra.mxu0 0
        %763 = vmatprep.subr.bf16.mxu0 0
        %764 = vmatpush2.bf16.msra.mxu0 0
        %765 = vmatprep.subr.bf16.mxu0 0
        %766 = vmatpush2.bf16.msra.mxu0 0
        %767 = vmatprep.subr.bf16.mxu0 0
        %768 = vmatpush2.bf16.msra.mxu0 0
        %769 = vmatprep.subr.bf16.mxu0 0
        %770 = vmatpush2.bf16.msra.mxu0 0
        %771 = vmatprep.subr.bf16.mxu0 0
        %772 = vmatpush2.bf16.msra.mxu0 0
        %773 = vmatprep.subr.bf16.mxu0 0
        %774 = vmatpush2.bf16.msra.mxu0 0
        %775 = vmatprep.mubr.bf16.mxu0 0
        %776 = vmatmul.mubr.bf16.gmra.mxu0 %v640
        %v777 = vpop.f32.mrf.mxu0
        %v778 = vadd.f32 %v696, %v777
        %v779 = vpop.f32.mrf.mxu0
        %v780 = vadd.f32 %v700, %v779
        %v781 = vpop.f32.mrf.mxu0
        %v782 = vpop.f32.mrf.mxu0
        %783 = vdwg.mxu0
        %v784 = vld [vmem:[%s8] sm:$0xff]
        %v785 = vld [vmem:[%s9] sm:$0xff]
        %v786 = vsub.f32 %v567, 1.0
        %v787 = vmul.f32 %v786, 1.25e+11
        %v788 = vld [vmem:[%s3] sm:$0xff]
        %v790 = vlaneseq
        %v791 = vshrl.u32 %v790, 7
        %v792 = vsub.s32 0, %v791
        %v793 = vrot.slane %v787, %v792
        %v795 = vsub.f32 %v793, %v788
        %v796 = vmul.f32 %v567, 0.125
        %v797 = vmul.f32 %v677, %v784
        %v798 = vmul.f32 %v778, %v785
        %v799 = vadd.f32 %v797, %v798
        %801 = vrot.lane.b32.xlu0 %v784, 64
        %v802 = vpop.permute.xlu0 %801
        %v804 = vmul.f32 %v677, %v802
        %806 = vrot.lane.b32.xlu0 %v785, 64
        %v807 = vpop.permute.xlu0 %806
        %v809 = vmul.f32 %v778, %v807
        %v810 = vadd.f32 %v804, %v809
        %v811 = vpack.c.bf16 %v799, %v799
        %v812 = vpack.c.bf16 %v810, %v810
        %814 = vrot.lane.b32.xlu0 %v812, 64
        %v815 = vpop.permute.xlu0 %814
        %v817 = vsel %vm638, %v811, 0
        %v820 = vsel %vm638, %v815, 0
        %822 = vmatprep.subr.bf16.mxu0 0
        %823 = vmatpush1.bf16.xpose.msra.mxu0 0
        %824 = vmatprep.subr.bf16.mxu0 0
        %825 = vmatpush1.bf16.xpose.msra.mxu0 0
        %826 = vmatprep.subr.bf16.mxu0 0
        %827 = vmatpush1.bf16.xpose.msra.mxu0 0
        %828 = vmatprep.subr.bf16.mxu0 0
        %829 = vmatpush1.bf16.xpose.msra.mxu0 0
        %830 = vmatprep.subr.bf16.mxu0 0
        %831 = vmatpush1.bf16.xpose.msra.mxu0 0
        %832 = vmatprep.subr.bf16.mxu0 0
        %833 = vmatpush1.bf16.xpose.msra.mxu0 0
        %834 = vmatprep.subr.bf16.mxu0 0
        %835 = vmatpush1.bf16.xpose.msra.mxu0 0
        %836 = vmatprep.subr.bf16.mxu0 0
        %837 = vmatpush1.bf16.xpose.msra.mxu0 %v820
        %838 = vmatprep.subr.bf16.mxu0 0
        %839 = vmatpush2.bf16.xpose.msra.mxu0 0
        %840 = vmatprep.subr.bf16.mxu0 0
        %841 = vmatpush2.bf16.xpose.msra.mxu0 0
        %842 = vmatprep.subr.bf16.mxu0 0
        %843 = vmatpush2.bf16.xpose.msra.mxu0 0
        %844 = vmatprep.subr.bf16.mxu0 0
        %845 = vmatpush2.bf16.xpose.msra.mxu0 0
        %846 = vmatprep.subr.bf16.mxu0 0
        %847 = vmatpush2.bf16.xpose.msra.mxu0 0
        %848 = vmatprep.subr.bf16.mxu0 0
        %849 = vmatpush2.bf16.xpose.msra.mxu0 0
        %850 = vmatprep.subr.bf16.mxu0 0
        %851 = vmatpush2.bf16.xpose.msra.mxu0 0
        %852 = vmatprep.subr.bf16.mxu0 0
        %853 = vmatpush2.bf16.xpose.msra.mxu0 0
        %854 = vmatprep.mubr.bf16.mxu0 0
        %855 = vmatmul.mubr.bf16.gmra.mxu0 %v817
        %v856 = vpop.f32.mrf.mxu0
        %v857 = vadd.f32 0.0, %v856
        %v858 = vpop.f32.mrf.mxu0
        %v859 = vpop.f32.mrf.mxu0
        %v860 = vpop.f32.mrf.mxu0
        %861 = vdwg.mxu0
        %v863 = vlaneseq
        %v864 = vshrl.u32 %v863, 7
        %v865 = vsub.s32 0, %v864
        %v866 = vrot.slane %v796, %v865
        %v868 = vmul.f32 %v857, %v866
        %v869 = vadd.f32 %v868, %v795
        %vm870 = vcmask 64512
        %871 = vst.msk [vmem:[%s535] sm:$0xff] %vm870, %v869
        %vm872 = vcmp.eq.f32.partialorder %v869, -1.25e+11
        %v873 = vsel %vm872, 0.0, %v869
        %vm874 = vcmp.eq.f32.partialorder %v873, -2.5e+11
        %v875 = vsel %vm874, 0.0, %v873
        %v876 = vmul.f32 %v679, %v784
        %v877 = vmul.f32 %v780, %v785
        %v878 = vadd.f32 %v876, %v877
        %v879 = vmul.f32 %v679, %v802
        %v880 = vmul.f32 %v780, %v807
        %v881 = vadd.f32 %v879, %v880
        %v882 = vpack.c.bf16 %v878, %v878
        %v883 = vpack.c.bf16 %v881, %v881
        %885 = vrot.lane.b32.xlu0 %v883, 64
        %v886 = vpop.permute.xlu0 %885
        %v888 = vsel %vm638, %v882, 0
        %v891 = vsel %vm638, %v886, 0
        %893 = vmatprep.subr.bf16.mxu0 0
        %894 = vmatpush1.bf16.xpose.msra.mxu0 0
        %895 = vmatprep.subr.bf16.mxu0 0
        %896 = vmatpush1.bf16.xpose.msra.mxu0 0
        %897 = vmatprep.subr.bf16.mxu0 0
        %898 = vmatpush1.bf16.xpose.msra.mxu0 0
        %899 = vmatprep.subr.bf16.mxu0 0
        %900 = vmatpush1.bf16.xpose.msra.mxu0 0
        %901 = vmatprep.subr.bf16.mxu0 0
        %902 = vmatpush1.bf16.xpose.msra.mxu0 0
        %903 = vmatprep.subr.bf16.mxu0 0
        %904 = vmatpush1.bf16.xpose.msra.mxu0 0
        %905 = vmatprep.subr.bf16.mxu0 0
        %906 = vmatpush1.bf16.xpose.msra.mxu0 0
        %907 = vmatprep.subr.bf16.mxu0 0
        %908 = vmatpush1.bf16.xpose.msra.mxu0 %v891
        %909 = vmatprep.subr.bf16.mxu0 0
        %910 = vmatpush2.bf16.xpose.msra.mxu0 0
        %911 = vmatprep.subr.bf16.mxu0 0
        %912 = vmatpush2.bf16.xpose.msra.mxu0 0
        %913 = vmatprep.subr.bf16.mxu0 0
        %914 = vmatpush2.bf16.xpose.msra.mxu0 0
        %915 = vmatprep.subr.bf16.mxu0 0
        %916 = vmatpush2.bf16.xpose.msra.mxu0 0
        %917 = vmatprep.subr.bf16.mxu0 0
        %918 = vmatpush2.bf16.xpose.msra.mxu0 0
        %919 = vmatprep.subr.bf16.mxu0 0
        %920 = vmatpush2.bf16.xpose.msra.mxu0 0
        %921 = vmatprep.subr.bf16.mxu0 0
        %922 = vmatpush2.bf16.xpose.msra.mxu0 0
        %923 = vmatprep.subr.bf16.mxu0 0
        %924 = vmatpush2.bf16.xpose.msra.mxu0 0
        %925 = vmatprep.mubr.bf16.mxu0 0
        %926 = vmatmul.mubr.bf16.gmra.mxu0 %v888
        %v927 = vpop.f32.mrf.mxu0
        %v928 = vadd.f32 0.0, %v927
        %v929 = vpop.f32.mrf.mxu0
        %v930 = vpop.f32.mrf.mxu0
        %v931 = vpop.f32.mrf.mxu0
        %932 = vdwg.mxu0
        %v933 = vmul.f32 %v928, %v866
        %v934 = vadd.f32 %v933, %v795
        %s935 = scalar_lea.vmem %s535, 8 [#allocation2]
        %936 = vst.msk [vmem:[%s935] sm:$0xff] %vm870, %v934
        %vm937 = vcmp.eq.f32.partialorder %v934, -1.25e+11
        %v938 = vsel %vm937, 0.0, %v934
        %vm939 = vcmp.eq.f32.partialorder %v938, -2.5e+11
        %v940 = vsel %vm939, 0.0, %v938
        %v941 = vadd.f32 %v875, %v940
        %942 = vxpose.xlu0.b32.start [1/16] %v941, 128
        %943 = vxpose.xlu0.b32.cont [2/16] 0.0, 128
        %944 = vxpose.xlu0.b32.cont [3/16] 0.0, 128
        %945 = vxpose.xlu0.b32.cont [4/16] 0.0, 128
        %946 = vxpose.xlu0.b32.cont [5/16] 0.0, 128
        %947 = vxpose.xlu0.b32.cont [6/16] 0.0, 128
        %948 = vxpose.xlu0.b32.cont [7/16] 0.0, 128
        %949 = vxpose.xlu0.b32.cont [8/16] 0.0, 128
        %950 = vxpose.xlu0.b32.cont [9/16] 0.0, 128
        %951 = vxpose.xlu0.b32.cont [10/16] 0.0, 128
        %952 = vxpose.xlu0.b32.cont [11/16] 0.0, 128
        %953 = vxpose.xlu0.b32.cont [12/16] 0.0, 128
        %954 = vxpose.xlu0.b32.cont [13/16] 0.0, 128
        %955 = vxpose.xlu0.b32.cont [14/16] 0.0, 128
        %956 = vxpose.xlu0.b32.cont [15/16] 0.0, 128
        %957 = vxpose.xlu0.b32.end [16/16] 0.0, 128
        %v958 = vpop.trf.xlu0
        %v959 = vpop.trf.xlu0
        %v960 = vpop.trf.xlu0
        %v961 = vpop.trf.xlu0
        %v962 = vpop.trf.xlu0
        %v963 = vpop.trf.xlu0
        %v964 = vpop.trf.xlu0
        %v965 = vpop.trf.xlu0
        %v966 = vpop.trf.xlu0
        %v967 = vpop.trf.xlu0
        %v968 = vpop.trf.xlu0
        %v969 = vpop.trf.xlu0
        %v970 = vpop.trf.xlu0
        %v971 = vpop.trf.xlu0
        %v972 = vpop.trf.xlu0
        %v973 = vpop.trf.xlu0
        %v975 = vsel %vm870, %v958, 0
        %977 = vmatprep.subr.mxu0 0.0
        %978 = vmatpush1.msra.mxu0 0.0
        %979 = vmatprep.subr.mxu0 0.0
        %980 = vmatpush1.msra.mxu0 0.0
        %981 = vmatprep.subr.mxu0 0.0
        %982 = vmatpush1.msra.mxu0 0.0
        %983 = vmatprep.subr.mxu0 0.0
        %984 = vmatpush1.msra.mxu0 0.0
        %985 = vmatprep.subr.mxu0 0.0
        %986 = vmatpush1.msra.mxu0 0.0
        %987 = vmatprep.subr.mxu0 0.0
        %988 = vmatpush1.msra.mxu0 0.0
        %989 = vmatprep.subr.mxu0 0.0
        %990 = vmatpush1.msra.mxu0 0.0
        %991 = vmatprep.subr.mxu0 0.0
        %992 = vmatpush1.msra.mxu0 0.0
        %993 = vmatprep.subr.mxu0 0.0
        %994 = vmatpush1.msra.mxu0 0.0
        %995 = vmatprep.subr.mxu0 0.0
        %996 = vmatpush1.msra.mxu0 0.0
        %997 = vmatprep.subr.mxu0 0.0
        %998 = vmatpush1.msra.mxu0 0.0
        %999 = vmatprep.subr.mxu0 0.0
        %1000 = vmatpush1.msra.mxu0 0.0
        %1001 = vmatprep.subr.mxu0 0.0
        %1002 = vmatpush1.msra.mxu0 0.0
        %1003 = vmatprep.subr.mxu0 0.0
        %1004 = vmatpush1.msra.mxu0 0.0
        %1005 = vmatprep.subr.mxu0 0.0
        %1006 = vmatpush1.msra.mxu0 0.0
        %1007 = vmatprep.subr.mxu0 0.0
        %1008 = vmatpush1.msra.mxu0 1.0
        %1009 = vmatprep.subr.mxu0 0.0
        %1010 = vmatpush2.msra.mxu0 0.0
        %1011 = vmatprep.subr.mxu0 0.0
        %1012 = vmatpush2.msra.mxu0 0.0
        %1013 = vmatprep.subr.mxu0 0.0
        %1014 = vmatpush2.msra.mxu0 0.0
        %1015 = vmatprep.subr.mxu0 0.0
        %1016 = vmatpush2.msra.mxu0 0.0
        %1017 = vmatprep.subr.mxu0 0.0
        %1018 = vmatpush2.msra.mxu0 0.0
        %1019 = vmatprep.subr.mxu0 0.0
        %1020 = vmatpush2.msra.mxu0 0.0
        %1021 = vmatprep.subr.mxu0 0.0
        %1022 = vmatpush2.msra.mxu0 0.0
        %1023 = vmatprep.subr.mxu0 0.0
        %1024 = vmatpush2.msra.mxu0 0.0
        %1025 = vmatprep.subr.mxu0 0.0
        %1026 = vmatpush2.msra.mxu0 0.0
        %1027 = vmatprep.subr.mxu0 0.0
        %1028 = vmatpush2.msra.mxu0 0.0
        %1029 = vmatprep.subr.mxu0 0.0
        %1030 = vmatpush2.msra.mxu0 0.0
        %1031 = vmatprep.subr.mxu0 0.0
        %1032 = vmatpush2.msra.mxu0 0.0
        %1033 = vmatprep.subr.mxu0 0.0
        %1034 = vmatpush2.msra.mxu0 0.0
        %1035 = vmatprep.subr.mxu0 0.0
        %1036 = vmatpush2.msra.mxu0 0.0
        %1037 = vmatprep.subr.mxu0 0.0
        %1038 = vmatpush2.msra.mxu0 0.0
        %1039 = vmatprep.subr.mxu0 0.0
        %1040 = vmatpush2.msra.mxu0 0.0
        %1041 = vmatprep.mubr.f32.mxu0 0.0
        %1042 = vmatmul.mubr.f32.gmra.mxu0 %v975
        %v1043 = vpop.f32.mrf.mxu0
        %v1044 = vadd.f32 0.0, %v1043
        %v1045 = vpop.f32.mrf.mxu0
        %1046 = vdwg.mxu0
        %v1047 = vsel %vm870, %v941, 0.0
        %1048 = vadd.xlane.f32.xlu0 %v1047
        %v1049 = vpop.xlane.xlu0 %1048
        %v1050 = vld [vmem:[%s10] sm:$0xf]
        %v1051 = vld [vmem:[%s10 + $0x4] sm:$0xf]
        %v1052 = vld [vmem:[%s10 + $0x8] sm:$0xf]
        %v1053 = vld [vmem:[%s10 + $0xc] sm:$0xf]
        %v1054 = vld [vmem:[%s10 + $0x10] sm:$0xf]
        %v1055 = vld [vmem:[%s10 + $0x14] sm:$0xf]
        %v1056 = vld [vmem:[%s10 + $0x18] sm:$0xf]
        %v1057 = vld [vmem:[%s10 + $0x1c] sm:$0xf]
        %v1058 = vld [vmem:[%s11] sm:$0x1]
        %v1059 = vld [vmem:[%s12] sm:$0x1]
        %v1060 = vld [vmem:[%s13] sm:$0x1]
        %v1061 = vxor.u32 %v1044, 2147483648
        %v1062 = vmul.f32 %v1061, 1.442695
        %v1063 = vpow.pop %v1062
        %v1064 = vadd.f32 %v1063, 1.0
        %v1065 = vrcp.pop %v1064
        %v1066 = vmul.f32 1.0, %v1065
        %vm1067 = vcmp.eq.f32.partialorder %v1066, 0.5
        %v1068 = vsel %vm1067, 0.0, %v1066
        %1070 = vset.pattern.permute.xlu0 0
        %1071 = vperm.xlu0 %1070, %v1068
        %v1072 = vpop.permute.xlu0 %1071
        %v1074 = vmul.f32 %v1072, %v568
        %v1075 = vpack.c.bf16 %v1074, %v1074
        %v1077 = vlaneseq
        %v1078 = vshrl.u32 %v1077, 7
        %v1079 = vsub.s32 0, %v1078
        %v1080 = vrot.slane %v1058, %v1079
        %v1090 = vunpack.c.l.b16 %v1050
        %v1091 = vunpack.c.l.b16 %v1051
        %v1092 = vunpack.c.l.b16 %v1052
        %v1093 = vunpack.c.l.b16 %v1053
        %v1094 = vunpack.c.l.b16 %v1054
        %v1095 = vunpack.c.l.b16 %v1055
        %v1096 = vunpack.c.l.b16 %v1056
        %v1097 = vunpack.c.l.b16 %v1057
        %v1098 = vpack.c.b16 %v1091, %v1090
        %v1099 = vpack.c.b16 %v1093, %v1092
        %v1100 = vpack.c.b16 %v1095, %v1094
        %v1101 = vpack.c.b16 %v1097, %v1096
        %v1107 = vsel %vm638, %v1075, 0
        %1109 = vmatprep.subr.bf16.mxu0 0
        %1110 = vmatpush1.bf16.msra.mxu0 0
        %1111 = vmatprep.subr.bf16.mxu0 0
        %1112 = vmatpush1.bf16.msra.mxu0 0
        %1113 = vmatprep.subr.bf16.mxu0 0
        %1114 = vmatpush1.bf16.msra.mxu0 0
        %1115 = vmatprep.subr.bf16.mxu0 0
        %1116 = vmatpush1.bf16.msra.mxu0 0
        %1117 = vmatprep.subr.bf16.mxu0 0
        %1118 = vmatpush1.bf16.msra.mxu0 %v1101
        %1119 = vmatprep.subr.bf16.mxu0 0
        %1120 = vmatpush1.bf16.msra.mxu0 %v1100
        %1121 = vmatprep.subr.bf16.mxu0 0
        %1122 = vmatpush1.bf16.msra.mxu0 %v1099
        %1123 = vmatprep.subr.bf16.mxu0 0
        %1124 = vmatpush1.bf16.msra.mxu0 %v1098
        %1125 = vmatprep.subr.bf16.mxu0 0
        %1126 = vmatpush2.bf16.msra.mxu0 0
        %1127 = vmatprep.subr.bf16.mxu0 0
        %1128 = vmatpush2.bf16.msra.mxu0 0
        %1129 = vmatprep.subr.bf16.mxu0 0
        %1130 = vmatpush2.bf16.msra.mxu0 0
        %1131 = vmatprep.subr.bf16.mxu0 0
        %1132 = vmatpush2.bf16.msra.mxu0 0
        %1133 = vmatprep.subr.bf16.mxu0 0
        %1134 = vmatpush2.bf16.msra.mxu0 0
        %1135 = vmatprep.subr.bf16.mxu0 0
        %1136 = vmatpush2.bf16.msra.mxu0 0
        %1137 = vmatprep.subr.bf16.mxu0 0
        %1138 = vmatpush2.bf16.msra.mxu0 0
        %1139 = vmatprep.subr.bf16.mxu0 0
        %1140 = vmatpush2.bf16.msra.mxu0 0
        %1141 = vmatprep.mubr.bf16.mxu0 0
        %1142 = vmatmul.mubr.bf16.gmra.mxu0 %v1107
        %v1143 = vpop.f32.mrf.mxu0
        %v1144 = vadd.f32 %v1080, %v1143
        %v1145 = vpop.f32.mrf.mxu0
        %v1146 = vpop.f32.mrf.mxu0
        %v1147 = vpop.f32.mrf.mxu0
        %1148 = vdwg.mxu0
        %v1149 = vadd.f32 %v1144, %v568
        %v1150 = vsel %vm638, %v1149, 0.0
        %1151 = vadd.xlane.f32.xlu0 %v1150
        %v1152 = vpop.xlane.xlu0 %1151
        %v1153 = vrcp.pop 64.0
        %v1154 = vmul.f32 %v1152, %v1153
        %v1155 = vsub.f32 %v1149, %v1154
        %v1156 = vmul.f32 %v1155, %v1155
        %v1157 = vsel %vm638, %v1156, 0.0
        %1158 = vadd.xlane.f32.xlu0 %v1157
        %v1159 = vpop.xlane.xlu0 %1158
        %v1160 = vmul.f32 %v1159, %v1153
        %v1161 = vadd.f32 %v1160, 1e-05
        %v1162 = vrsqrt.pop %v1161
        %v1163 = vmul.f32 %v1155, %v1162
        %v1165 = vlaneseq
        %v1166 = vshrl.u32 %v1165, 7
        %v1167 = vsub.s32 0, %v1166
        %v1168 = vrot.slane %v1059, %v1167
        %v1170 = vmul.f32 %v1163, %v1168
        %v1172 = vlaneseq
        %v1173 = vshrl.u32 %v1172, 7
        %v1174 = vsub.s32 0, %v1173
        %v1175 = vrot.slane %v1060, %v1174
        %v1177 = vadd.f32 %v1170, %v1175
        %v1178 = vpack.c.bf16 %v1177, %v1177
        %vm1179 = vcmask 519168
        %1180 = vst.msk [vmem:[%s561] sm:$0xf] %vm1179, %v1178
        %v1181 = vxor.u32 %v1049, 2147483648
        %v1182 = vmul.f32 %v1181, 1.442695
        %v1183 = vpow.pop %v1182
        %v1184 = vadd.f32 %v1183, 1.0
        %v1185 = vrcp.pop %v1184
        %v1186 = vmul.f32 1.0, %v1185
        %vm1187 = vcmp.eq.f32.partialorder %v1186, 0.5
        %v1188 = vsel %vm1187, 0.0, %v1186
        %v1189 = vmul.f32 %v1188, %v568
        %v1190 = vpack.c.bf16 %v1189, %v1189
        %v1192 = vsel %vm638, %v1190, 0
        %1194 = vmatprep.subr.bf16.mxu0 0
        %1195 = vmatpush1.bf16.msra.mxu0 0
        %1196 = vmatprep.subr.bf16.mxu0 0
        %1197 = vmatpush1.bf16.msra.mxu0 0
        %1198 = vmatprep.subr.bf16.mxu0 0
        %1199 = vmatpush1.bf16.msra.mxu0 0
        %1200 = vmatprep.subr.bf16.mxu0 0
        %1201 = vmatpush1.bf16.msra.mxu0 0
        %1202 = vmatprep.subr.bf16.mxu0 0
        %1203 = vmatpush1.bf16.msra.mxu0 %v1101
        %1204 = vmatprep.subr.bf16.mxu0 0
        %1205 = vmatpush1.bf16.msra.mxu0 %v1100
        %1206 = vmatprep.subr.bf16.mxu0 0
        %1207 = vmatpush1.bf16.msra.mxu0 %v1099
        %1208 = vmatprep.subr.bf16.mxu0 0
        %1209 = vmatpush1.bf16.msra.mxu0 %v1098
        %1210 = vmatprep.subr.bf16.mxu0 0
        %1211 = vmatpush2.bf16.msra.mxu0 0
        %1212 = vmatprep.subr.bf16.mxu0 0
        %1213 = vmatpush2.bf16.msra.mxu0 0
        %1214 = vmatprep.subr.bf16.mxu0 0
        %1215 = vmatpush2.bf16.msra.mxu0 0
        %1216 = vmatprep.subr.bf16.mxu0 0
        %1217 = vmatpush2.bf16.msra.mxu0 0
        %1218 = vmatprep.subr.bf16.mxu0 0
        %1219 = vmatpush2.bf16.msra.mxu0 0
        %1220 = vmatprep.subr.bf16.mxu0 0
        %1221 = vmatpush2.bf16.msra.mxu0 0
        %1222 = vmatprep.subr.bf16.mxu0 0
        %1223 = vmatpush2.bf16.msra.mxu0 0
        %1224 = vmatprep.subr.bf16.mxu0 0
        %1225 = vmatpush2.bf16.msra.mxu0 0
        %1226 = vmatprep.mubr.bf16.mxu0 0
        %1227 = vmatmul.mubr.bf16.gmra.mxu0 %v1192
        %v1228 = vpop.f32.mrf.mxu0
        %v1229 = vadd.f32 %v1080, %v1228
        %v1230 = vpop.f32.mrf.mxu0
        %v1231 = vpop.f32.mrf.mxu0
        %v1232 = vpop.f32.mrf.mxu0
        %1233 = vdwg.mxu0
        %v1234 = vadd.f32 %v1229, %v568
        %v1235 = vsel %vm638, %v1234, 0.0
        %1236 = vadd.xlane.f32.xlu0 %v1235
        %v1237 = vpop.xlane.xlu0 %1236
        %v1238 = vmul.f32 %v1237, %v1153
        %v1239 = vsub.f32 %v1234, %v1238
        %v1240 = vmul.f32 %v1239, %v1239
        %v1241 = vsel %vm638, %v1240, 0.0
        %1242 = vadd.xlane.f32.xlu0 %v1241
        %v1243 = vpop.xlane.xlu0 %1242
        %v1244 = vmul.f32 %v1243, %v1153
        %v1245 = vadd.f32 %v1244, 1e-05
        %v1246 = vrsqrt.pop %v1245
        %v1247 = vmul.f32 %v1239, %v1246
        %v1248 = vmul.f32 %v1247, %v1168
        %v1249 = vadd.f32 %v1248, %v1175
        %v1250 = vpack.c.bf16 %v1249, %v1249
        %1251 = vst.msk [vmem:[%s565] sm:$0xf] %vm1179, %v1250
        %s1252 = sand.u32 %s348, 1
        %s1253 = scalar_lea.sflag [#allocation3], %s1252
        %s1254 = sand.u32 %s348, 1
        %s1255 = smul.addr %s1254, 16
        %s1256 = scalar_lea.vmem [#allocation2], %s1255
        %p1257 = scmp.lt.s32.totalorder %s31, 1
        %s1258 = scalar_select %p1257, %s31, 1
        %s1259 = smul.addr %s1258, 4
        %s1260 = scalar_lea.vmem %s15, %s1259
        %p1261 = scmp.lt.s32.totalorder %s31, 1
        %s1262 = scalar_select %p1261, %s31, 1
        %s1263 = smul.addr %s1262, 4
        %s1264 = scalar_lea.vmem %s16, %s1263
        // Predicated region
        $region77: #{remodel_forward.3} parent=75 // pred_check
          %p1265 = pneg %p358
        $region78: #{remodel_forward.3} parent=75 // pred_check_branch
          %1267 = sbr.rel (%p1265) target = $region80
        $region79: #{remodel_forward.3} parent=75 // pred_region
          %s1269 = ssub.s32 256, 256
          %1270 = vsyncadd %s1253, %s1269
          %s1271 = smul.addr %s31, 2
          %s1272 = smul.addr %s1271, 128
          %s1273 = scalar_lea.hbm %s14, %s1272
          %s1274 = sshll.u32 %s1256, 4
          %s1275 = int_to_ptr.vmem [resolvable:$true] %s1274
          %1280 = dma.vmem_to_hbm [thread:$0]  %s1275, 256, %s1273, %s1253, 128, 128, 8
        $region80: #{remodel_forward.3} parent=75 // pred_fallthru
          _
        // Predicated region
        $region81: #{remodel_forward.3} parent=75 // pred_check
          %p1281 = pneg %p384
        $region82: #{remodel_forward.3} parent=75 // pred_check_branch
          %1283 = sbr.rel (%p1281) target = $region84
        $region83: #{remodel_forward.3} parent=75 // pred_region
          _
        $region84: #{remodel_forward.3} parent=75 // pred_fallthru
          _
        // Predicated region
        $region85: #{remodel_forward.3} parent=75 // pred_check
          %p1284 = pneg %p410
        $region86: #{remodel_forward.3} parent=75 // pred_check_branch
          %1286 = sbr.rel (%p1284) target = $region88
        $region87: #{remodel_forward.3} parent=75 // pred_region
          _
        $region88: #{remodel_forward.3} parent=75 // pred_fallthru
          _
      $region76: #{remodel_forward.3} parent=5 // pred_fallthru
        _
      %p1287 = scmp.le.s32.totalorder 2, %s26
      // Predicated region
      $region89: #{remodel_forward.3} parent=5 // pred_check
        %p1288 = pneg %p1287
      $region90: #{remodel_forward.3} parent=5 // pred_check_branch
        %1290 = sbr.rel (%p1288) target = $region92
      $region91: #{remodel_forward.3} parent=5 // pred_region
        %s1291 = ssub.s32 %s26, 2
        // Predicated region
        $region93: #{remodel_forward.3} parent=91 // pred_check
          %p1292 = pneg %p364
        $region94: #{remodel_forward.3} parent=91 // pred_check_branch
          %1294 = sbr.rel (%p1292) target = $region96
        $region95: #{remodel_forward.3} parent=91 // pred_region
          %s1295 = sand.u32 %s349, 1
          %s1296 = scalar_lea.sflag [#allocation3], %s1295
          %s1297 = sand.u32 %s349, 1
          %s1298 = smul.addr %s1297, 16
          %s1299 = scalar_lea.vmem [#allocation2], %s1298
          %1300 = dma.done %s1296, 256
        $region96: #{remodel_forward.3} parent=91 // pred_fallthru
          _
        // Predicated region
        $region97: #{remodel_forward.3} parent=91 // pred_check
          %p1301 = pneg %p390
        $region98: #{remodel_forward.3} parent=91 // pred_check_branch
          %1303 = sbr.rel (%p1301) target = $region100
        $region99: #{remodel_forward.3} parent=91 // pred_region
          %p1304 = scmp.lt.s32.totalorder %s32, 1
          %s1305 = scalar_select %p1304, %s32, 1
          %s1306 = smul.addr %s1305, 4
          %s1307 = scalar_lea.vmem %s15, %s1306
        $region100: #{remodel_forward.3} parent=91 // pred_fallthru
          _
        // Predicated region
        $region101: #{remodel_forward.3} parent=91 // pred_check
          %p1308 = pneg %p416
        $region102: #{remodel_forward.3} parent=91 // pred_check_branch
          %1310 = sbr.rel (%p1308) target = $region104
        $region103: #{remodel_forward.3} parent=91 // pred_region
          %p1311 = scmp.lt.s32.totalorder %s32, 1
          %s1312 = scalar_select %p1311, %s32, 1
          %s1313 = smul.addr %s1312, 4
          %s1314 = scalar_lea.vmem %s16, %s1313
        $region104: #{remodel_forward.3} parent=91 // pred_fallthru
          _
      $region92: #{remodel_forward.3} parent=5 // pred_fallthru
        _
    $region6: #{remodel_forward.3} parent=1 // loop_footer
      %s30 = sadd.s32 1, %s26
    $region7: #{remodel_forward.3} parent=1 // loop_footer_branch
      %25 = sbr.rel target = $region3
    $region8: #{remodel_forward.3} parent=1 // loop_exit
      _
    %1315 = vsyncpa [#allocation3], 1
    %s1316 = scalar_lea.sflag [#allocation3], 1
    %1317 = vsyncpa %s1316, 1

</llo_original>
